<compile_context>
chip_gen: v5e
topology: v5e:2x2
jax: 0.10.0
libtpu: 0.0.40
codegen_flags: <defaults>
</compile_context>

<pallas_src>
import jax
import jax.numpy as jnp
import numpy as np
from jax.experimental import pallas as pl
from jax.experimental.pallas import tpu as pltpu


# ----------------------------------------------------------------------------
# Pallas scorer kernel
# ----------------------------------------------------------------------------
def scorer_kernel(words_ref, prompts_ref,
                  wt1_ref, wt2_ref, bt1_ref, bt2_ref,
                  wl1_ref, wl2_ref, bl1_ref, bl2_ref,
                  w1a_ref, w1b_ref, w1c_ref, b1_ref,
                  w2_ref, b2_ref,
                  out_ref):
    bt_, W, D = words_ref.shape
    C = prompts_ref.shape[1]
    H = w1a_ref.shape[1]                      # 4*D
    cd = w1a_ref.dtype                        # MXU input dtype (bf16)
    f32 = jnp.float32

    words = words_ref[...].reshape(bt_ * W, D)       # [Bt*W, D]
    prompts = prompts_ref[...].reshape(bt_ * C, D)   # [Bt*C, D]

    # token / label projections (MXU, f32 accumulation).  Wt / Wl arrive
    # pre-split into (D, D) halves -> no lane-axis slicing of a 2D-wide result.
    t1 = jnp.dot(words, wt1_ref[...], preferred_element_type=f32) + bt1_ref[...]
    t2 = jnp.dot(words, wt2_ref[...], preferred_element_type=f32) + bt2_ref[...]
    l1 = jnp.dot(prompts, wl1_ref[...], preferred_element_type=f32) + bl1_ref[...]
    l2 = jnp.dot(prompts, wl2_ref[...], preferred_element_type=f32) + bl2_ref[...]

    # Linear(3D, 4D) on cat([t1, l1, t2*l2]) decomposed into three matmuls:
    #   h[b,w,c] = t1[b,w] @ W1a + l1[b,c] @ W1b + (t2[b,w]*l2[b,c]) @ W1c + b1
    # (b1 folded into the t1 term once -> no per-(w,c) broadcast add of b1).
    a = jnp.dot(t1.astype(cd), w1a_ref[...], preferred_element_type=f32) + b1_ref[...]
    bm = jnp.dot(l1.astype(cd), w1b_ref[...], preferred_element_type=f32)

    # cross term for every (b, w, c) pair in one matmul (W1c pushed once).
    x = (t2.reshape(bt_, W, 1, D) * l2.reshape(bt_, 1, C, D)).reshape(bt_ * W * C, D)
    cross = jnp.dot(x.astype(cd), w1c_ref[...], preferred_element_type=f32)   # [Bt*W*C, H]

    h = (cross.reshape(bt_, W, C, H)
         + a.reshape(bt_, W, 1, H)
         + bm.reshape(bt_, 1, C, H))
    h = jnp.maximum(h, 0.0)                   # Dropout = identity (eval mode)

    s = jnp.dot(h.reshape(bt_ * W * C, H).astype(cd), w2_ref[...],
                preferred_element_type=f32) + b2_ref[...]                     # [Bt*W*C, 3]
    out_ref[...] = s.reshape(bt_, W, C, 3)    # single full-block store, PyTorch layout


def _pick_batch_tile(B, W, C, D, act_budget_bytes=8 << 20):
    """Largest divisor of B whose fused-MLP activations fit the VMEM budget."""
    H = 4 * D
    for bt_tile in range(B, 0, -1):
        if B % bt_tile:
            continue
        act_bytes = bt_tile * W * C * (H + D) * 4 * 2   # cross + h (+ headroom), f32
        if act_bytes <= act_budget_bytes:
            return bt_tile
    return 1


def scorer_pallas(words_embedding, prompts_embedding, params,
                  compute_dtype=jnp.bfloat16, batch_tile=None):
    """words: [B, W, D], prompts: [B, C, D]  ->  logits [B, W, C, 3] (f32)."""
    B, W, D = words_embedding.shape
    C = prompts_embedding.shape[1]
    H = 4 * D
    wt, bt_, wl, bl, w1, b1, w2, b2 = params

    bt_tile = batch_tile if batch_tile is not None else _pick_batch_tile(B, W, C, D)
    assert B % bt_tile == 0, "batch tile must divide batch"

    cd, f32 = compute_dtype, jnp.float32
    # pre-split Wt/Wl so t1/t2, l1/l2 come from separate matmuls (no lane slices)
    wt1, wt2 = wt[:, :D].astype(cd), wt[:, D:].astype(cd)
    wl1, wl2 = wl[:, :D].astype(cd), wl[:, D:].astype(cd)
    bt1, bt2 = bt_[:D].reshape(1, D).astype(f32), bt_[D:].reshape(1, D).astype(f32)
    bl1, bl2 = bl[:D].reshape(1, D).astype(f32), bl[D:].reshape(1, D).astype(f32)
    # Linear(3D, 4D) split matches the cat([t1, l1, t2*l2]) ordering
    w1a, w1b, w1c = (w1[:D].astype(cd), w1[D:2 * D].astype(cd), w1[2 * D:].astype(cd))
    b1r = b1.reshape(1, H).astype(f32)
    w2c = w2.astype(cd)
    b2r = b2.reshape(1, 3).astype(f32)

    words_c = words_embedding.astype(cd)
    prompts_c = prompts_embedding.astype(cd)

    # scoped-VMEM budget: resident weights (+double-buffer worst case) + io + acts
    isz = np.dtype(cd).itemsize
    wbytes = (4 * D * D + 3 * D * H + H * 3) * isz + (4 * D + H + 3) * 4
    iobytes = 2 * bt_tile * (W + C) * D * isz + 2 * bt_tile * W * C * 3 * 4
    actbytes = (bt_tile * (W + C) * (2 * D + H) + 3 * bt_tile * W * C * (D + H)) * 4
    vmem_limit = int(min(64 << 20,
                         max(32 << 20, 2 * wbytes + iobytes + actbytes + (4 << 20))))

    grid = (B // bt_tile,)
    args = (words_c, prompts_c, wt1, wt2, bt1, bt2, wl1, wl2, bl1, bl2,
            w1a, w1b, w1c, b1r, w2c, b2r)

    def build(single_buffer_weights):
        wkw = {"pipeline_mode": pl.Buffered(1)} if single_buffer_weights else {}

        def wspec(shape):
            return pl.BlockSpec(shape, lambda i: (0, 0), **wkw)

        in_specs = [
            pl.BlockSpec((bt_tile, W, D), lambda i: (i, 0, 0)),   # words
            pl.BlockSpec((bt_tile, C, D), lambda i: (i, 0, 0)),   # prompts
            wspec((D, D)), wspec((D, D)), wspec((1, D)), wspec((1, D)),   # Wt1 Wt2 bt1 bt2
            wspec((D, D)), wspec((D, D)), wspec((1, D)), wspec((1, D)),   # Wl1 Wl2 bl1 bl2
            wspec((D, H)), wspec((D, H)), wspec((D, H)), wspec((1, H)),   # W1a W1b W1c b1
            wspec((H, 3)), wspec((1, 3)),                                 # W2 b2
        ]
        return pl.pallas_call(
            scorer_kernel,
            out_shape=jax.ShapeDtypeStruct((B, W, C, 3), jnp.float32),
            grid_spec=pltpu.PrefetchScalarGridSpec(
                num_scalar_prefetch=0,
                grid=grid,
                in_specs=in_specs,
                out_specs=pl.BlockSpec((bt_tile, W, C, 3), lambda i: (i, 0, 0, 0)),
            ),
            compiler_params=pltpu.CompilerParams(
                dimension_semantics=("parallel",),
                vmem_limit_bytes=vmem_limit),
        )

    try:
        # single-buffer the constant-index weight inputs (halves their VMEM
        # footprint — matters at real hidden sizes on v7x's 64 MiB VMEM)
        return build(single_buffer_weights=True)(*args)
    except Exception:
        # pipeline_mode / Buffered(1) unsupported on this jax build: fall back
        return build(single_buffer_weights=False)(*args)


# ----------------------------------------------------------------------------
# Plain-JAX glue: prompt / word-embedding extraction (scatter via one-hot)
# ----------------------------------------------------------------------------
def extract_representations(token_embeds, input_ids, attention_mask, text_lengths,
                            words_mask, class_token_index,
                            max_text_length, max_num_classes):
    B, S, D = token_embeds.shape
    m_dtype = attention_mask.dtype

    # --- words_embedding[b, words_mask[b,j]-1] = token_embeds[b, j]  (words_mask>0)
    tgt = jnp.arange(1, max_text_length + 1, dtype=words_mask.dtype)            # [W]
    onehot_w = (words_mask[:, None, :] == tgt[None, :, None]).astype(token_embeds.dtype)
    words_embedding = jnp.einsum('bws,bsd->bwd', onehot_w, token_embeds)
    mask = jnp.arange(max_text_length, dtype=text_lengths.dtype)[None, :] < text_lengths

    # --- prompts: k-th class-token position per batch
    class_token_mask = (input_ids == class_token_index)
    num_class_tokens = jnp.sum(class_token_mask, axis=-1, keepdims=True)
    order = jnp.cumsum(class_token_mask.astype(jnp.int32), axis=-1) - 1
    ks = jnp.arange(max_num_classes, dtype=jnp.int32)
    onehot_p = (class_token_mask[:, None, :]
                & (order[:, None, :] == ks[None, :, None])).astype(token_embeds.dtype)
    prompts_embedding = jnp.einsum('bcs,bsd->bcd', onehot_p, token_embeds)
    prompts_embedding_mask = (ks[None, :] < num_class_tokens).astype(m_dtype)
    return prompts_embedding, prompts_embedding_mask, words_embedding, mask


# ----------------------------------------------------------------------------
# TokenModel wrapper
# ----------------------------------------------------------------------------
class TokenModelPallas:
    def __init__(self, hidden_size, class_token_index, key):
        D = hidden_size
        self.class_token_index = class_token_index
        ks = jax.random.split(key, 8)
        scale = 0.05
        self.params = (
            scale * jax.random.normal(ks[0], (D, 2 * D), jnp.float32),     # proj_token W
            scale * jax.random.normal(ks[1], (2 * D,), jnp.float32),       # proj_token b
            scale * jax.random.normal(ks[2], (D, 2 * D), jnp.float32),     # proj_label W
            scale * jax.random.normal(ks[3], (2 * D,), jnp.float32),       # proj_label b
            scale * jax.random.normal(ks[4], (3 * D, 4 * D), jnp.float32), # mlp W1
            scale * jax.random.normal(ks[5], (4 * D,), jnp.float32),       # mlp b1
            scale * jax.random.normal(ks[6], (4 * D, 3), jnp.float32),     # mlp W2
            scale * jax.random.normal(ks[7], (3,), jnp.float32),           # mlp b2
        )

    def __call__(self, token_embeds, input_ids, attention_mask, text_lengths,
                 words_mask, max_text_length, max_num_classes):
        (prompts_embedding, prompts_embedding_mask,
         words_embedding, mask) = extract_representations(
            token_embeds, input_ids, attention_mask, text_lengths, words_mask,
            self.class_token_index, max_text_length, max_num_classes)
        scores = scorer_pallas(words_embedding, prompts_embedding, self.params)
        return dict(logits=scores,
                    prompts_embedding=prompts_embedding,
                    prompts_embedding_mask=prompts_embedding_mask,
                    words_embedding=words_embedding,
                    mask=mask)


# pure-JAX reference of the scorer (same bf16-MXU-input / f32-accumulate recipe)
def scorer_ref(words, prompts, params, compute_dtype=jnp.bfloat16):
    wt, bt_, wl, bl, w1, b1, w2, b2 = params
    D = words.shape[-1]
    B, W = words.shape[:2]
    C = prompts.shape[1]
    cd, f32 = compute_dtype, jnp.float32
    t = jnp.dot(words.astype(cd), wt.astype(cd), preferred_element_type=f32) + bt_
    l = jnp.dot(prompts.astype(cd), wl.astype(cd), preferred_element_type=f32) + bl
    t1, t2 = t[..., :D], t[..., D:]
    l1, l2 = l[..., :D], l[..., D:]
    cat = jnp.concatenate([
        jnp.broadcast_to(t1[:, :, None, :], (B, W, C, D)),
        jnp.broadcast_to(l1[:, None, :, :], (B, W, C, D)),
        t2[:, :, None, :] * l2[:, None, :, :]], axis=-1)
    h = jnp.maximum(jnp.dot(cat.astype(cd), w1.astype(cd),
                            preferred_element_type=f32) + b1, 0.0)
    return jnp.dot(h.astype(cd), w2.astype(cd), preferred_element_type=f32) + b2


if __name__ == "__main__":
    B, S, D = 2, 16, 32           # batch, wordpiece seq len, hidden size
    CLASS_TOKEN_INDEX = 1
    key = jax.random.PRNGKey(0)
    k_emb, k_model = jax.random.split(key)

    # TODO(synk): pretrained transformer encoder not reproduced; synthesize token_embeds.
    token_embeds = jax.random.normal(k_emb, (B, S, D), jnp.float32)

    input_ids = np.zeros((B, S), np.int32)
    words_mask = np.zeros((B, S), np.int32)
    attention_mask = np.ones((B, S), np.int32)
    # batch 0: 3 class tokens, 6 words
    input_ids[0] = [1, 5, 1, 6, 1, 7, 2, 10, 11, 12, 13, 14, 15, 0, 0, 0]
    words_mask[0, 7:13] = np.arange(1, 7)
    # batch 1: 4 class tokens, 8 words
    input_ids[1] = [1, 5, 1, 6, 1, 7, 1, 8, 2, 20, 21, 22, 23, 24, 25, 26]
    words_mask[1, 8:16] = np.arange(1, 9)
    text_lengths = np.array([[6], [8]], np.int32)

    max_text_length = int(text_lengths.max())                                # W = 8
    max_num_classes = int((input_ids == CLASS_TOKEN_INDEX).sum(-1).max())    # C = 4

    model = TokenModelPallas(D, CLASS_TOKEN_INDEX, k_model)
    out = model(token_embeds,
                jnp.asarray(input_ids), jnp.asarray(attention_mask),
                jnp.asarray(text_lengths), jnp.asarray(words_mask),
                max_text_length, max_num_classes)
    logits = jax.block_until_ready(out["logits"])

    # verify kernel against pure-JAX reference (bf16 MXU inputs, f32 accumulate)
    ref = scorer_ref(out["words_embedding"], out["prompts_embedding"], model.params)
    np.testing.assert_allclose(np.asarray(logits), np.asarray(ref), rtol=5e-3, atol=5e-3)
    assert logits.shape == (B, max_text_length, max_num_classes, 3)

    print("KERNEL_OK")
</pallas_src>

<mosaic_0001>
module attributes {stable_mosaic.version = 11 : i64} {
  func.func @scorer_kernel(%arg0: i32, %arg1: memref<2x8x32xbf16, #tpu.memory_space<vmem>>, %arg2: memref<2x4x32xbf16, #tpu.memory_space<vmem>>, %arg3: memref<32x32xbf16, #tpu.memory_space<vmem>>, %arg4: memref<32x32xbf16, #tpu.memory_space<vmem>>, %arg5: memref<1x32xf32, #tpu.memory_space<vmem>>, %arg6: memref<1x32xf32, #tpu.memory_space<vmem>>, %arg7: memref<32x32xbf16, #tpu.memory_space<vmem>>, %arg8: memref<32x32xbf16, #tpu.memory_space<vmem>>, %arg9: memref<1x32xf32, #tpu.memory_space<vmem>>, %arg10: memref<1x32xf32, #tpu.memory_space<vmem>>, %arg11: memref<32x128xbf16, #tpu.memory_space<vmem>>, %arg12: memref<32x128xbf16, #tpu.memory_space<vmem>>, %arg13: memref<32x128xbf16, #tpu.memory_space<vmem>>, %arg14: memref<1x128xf32, #tpu.memory_space<vmem>>, %arg15: memref<128x3xbf16, #tpu.memory_space<vmem>>, %arg16: memref<1x3xf32, #tpu.memory_space<vmem>>, %arg17: memref<2x8x4x3xf32, #tpu.memory_space<vmem>>) attributes {dimension_semantics = [#tpu.dimension_semantics<parallel>], iteration_bounds = array<i64: 1>, scalar_prefetch = 0 : i64, scratch_operands = 0 : i64, tpu.core_type = #tpu.core_type<tc>, window_params = [{transform_indices = @transform_0, window_bounds = array<i64: 2, 8, 32>}, {transform_indices = @transform_1, window_bounds = array<i64: 2, 4, 32>}, {pipeline_mode = #tpu.pipeline_mode<synchronous>, transform_indices = @transform_2, window_bounds = array<i64: 32, 32>}, {pipeline_mode = #tpu.pipeline_mode<synchronous>, transform_indices = @transform_3, window_bounds = array<i64: 32, 32>}, {pipeline_mode = #tpu.pipeline_mode<synchronous>, transform_indices = @transform_4, window_bounds = array<i64: 1, 32>}, {pipeline_mode = #tpu.pipeline_mode<synchronous>, transform_indices = @transform_5, window_bounds = array<i64: 1, 32>}, {pipeline_mode = #tpu.pipeline_mode<synchronous>, transform_indices = @transform_6, window_bounds = array<i64: 32, 32>}, {pipeline_mode = #tpu.pipeline_mode<synchronous>, transform_indices = @transform_7, window_bounds = array<i64: 32, 32>}, {pipeline_mode = #tpu.pipeline_mode<synchronous>, transform_indices = @transform_8, window_bounds = array<i64: 1, 32>}, {pipeline_mode = #tpu.pipeline_mode<synchronous>, transform_indices = @transform_9, window_bounds = array<i64: 1, 32>}, {pipeline_mode = #tpu.pipeline_mode<synchronous>, transform_indices = @transform_10, window_bounds = array<i64: 32, 128>}, {pipeline_mode = #tpu.pipeline_mode<synchronous>, transform_indices = @transform_11, window_bounds = array<i64: 32, 128>}, {pipeline_mode = #tpu.pipeline_mode<synchronous>, transform_indices = @transform_12, window_bounds = array<i64: 32, 128>}, {pipeline_mode = #tpu.pipeline_mode<synchronous>, transform_indices = @transform_13, window_bounds = array<i64: 1, 128>}, {pipeline_mode = #tpu.pipeline_mode<synchronous>, transform_indices = @transform_14, window_bounds = array<i64: 128, 3>}, {pipeline_mode = #tpu.pipeline_mode<synchronous>, transform_indices = @transform_15, window_bounds = array<i64: 1, 3>}, {transform_indices = @transform_16, window_bounds = array<i64: 2, 8, 4, 3>}]} {
    %c0 = arith.constant 0 : index
    %c0_0 = arith.constant 0 : index
    %c0_1 = arith.constant 0 : index
    %0 = vector.load %arg1[%c0, %c0_0, %c0_1] : memref<2x8x32xbf16, #tpu.memory_space<vmem>>, vector<2x8x32xbf16>
    %1 = vector.shape_cast %0 : vector<2x8x32xbf16> to vector<16x32xbf16>
    %c0_2 = arith.constant 0 : index
    %c0_3 = arith.constant 0 : index
    %c0_4 = arith.constant 0 : index
    %2 = vector.load %arg2[%c0_2, %c0_3, %c0_4] : memref<2x4x32xbf16, #tpu.memory_space<vmem>>, vector<2x4x32xbf16>
    %3 = vector.shape_cast %2 : vector<2x4x32xbf16> to vector<8x32xbf16>
    %c0_5 = arith.constant 0 : index
    %c0_6 = arith.constant 0 : index
    %4 = vector.load %arg3[%c0_5, %c0_6] : memref<32x32xbf16, #tpu.memory_space<vmem>>, vector<32x32xbf16>
    %cst = arith.constant dense<0.000000e+00> : vector<16x32xf32>
    %5 = tpu.matmul %1, %4, %cst {dimension_numbers = #tpu.dot_dimension_numbers<[1], [0], [0], [1], [0, 0, 1, 1], [], []>} : vector<16x32xbf16>, vector<32x32xbf16>, vector<16x32xf32> -> vector<16x32xf32>
    %c0_7 = arith.constant 0 : index
    %c0_8 = arith.constant 0 : index
    %6 = vector.load %arg5[%c0_7, %c0_8] : memref<1x32xf32, #tpu.memory_space<vmem>>, vector<1x32xf32>
    %7 = vector.broadcast %6 : vector<1x32xf32> to vector<16x32xf32>
    %8 = arith.addf %5, %7 : vector<16x32xf32>
    %c0_9 = arith.constant 0 : index
    %c0_10 = arith.constant 0 : index
    %9 = vector.load %arg4[%c0_9, %c0_10] : memref<32x32xbf16, #tpu.memory_space<vmem>>, vector<32x32xbf16>
    %cst_11 = arith.constant dense<0.000000e+00> : vector<16x32xf32>
    %10 = tpu.matmul %1, %9, %cst_11 {dimension_numbers = #tpu.dot_dimension_numbers<[1], [0], [0], [1], [0, 0, 1, 1], [], []>} : vector<16x32xbf16>, vector<32x32xbf16>, vector<16x32xf32> -> vector<16x32xf32>
    %c0_12 = arith.constant 0 : index
    %c0_13 = arith.constant 0 : index
    %11 = vector.load %arg6[%c0_12, %c0_13] : memref<1x32xf32, #tpu.memory_space<vmem>>, vector<1x32xf32>
    %12 = vector.broadcast %11 : vector<1x32xf32> to vector<16x32xf32>
    %13 = arith.addf %10, %12 : vector<16x32xf32>
    %c0_14 = arith.constant 0 : index
    %c0_15 = arith.constant 0 : index
    %14 = vector.load %arg7[%c0_14, %c0_15] : memref<32x32xbf16, #tpu.memory_space<vmem>>, vector<32x32xbf16>
    %cst_16 = arith.constant dense<0.000000e+00> : vector<8x32xf32>
    %15 = tpu.matmul %3, %14, %cst_16 {dimension_numbers = #tpu.dot_dimension_numbers<[1], [0], [0], [1], [0, 0, 1, 1], [], []>} : vector<8x32xbf16>, vector<32x32xbf16>, vector<8x32xf32> -> vector<8x32xf32>
    %c0_17 = arith.constant 0 : index
    %c0_18 = arith.constant 0 : index
    %16 = vector.load %arg9[%c0_17, %c0_18] : memref<1x32xf32, #tpu.memory_space<vmem>>, vector<1x32xf32>
    %17 = vector.broadcast %16 : vector<1x32xf32> to vector<8x32xf32>
    %18 = arith.addf %15, %17 : vector<8x32xf32>
    %c0_19 = arith.constant 0 : index
    %c0_20 = arith.constant 0 : index
    %19 = vector.load %arg8[%c0_19, %c0_20] : memref<32x32xbf16, #tpu.memory_space<vmem>>, vector<32x32xbf16>
    %cst_21 = arith.constant dense<0.000000e+00> : vector<8x32xf32>
    %20 = tpu.matmul %3, %19, %cst_21 {dimension_numbers = #tpu.dot_dimension_numbers<[1], [0], [0], [1], [0, 0, 1, 1], [], []>} : vector<8x32xbf16>, vector<32x32xbf16>, vector<8x32xf32> -> vector<8x32xf32>
    %c0_22 = arith.constant 0 : index
    %c0_23 = arith.constant 0 : index
    %21 = vector.load %arg10[%c0_22, %c0_23] : memref<1x32xf32, #tpu.memory_space<vmem>>, vector<1x32xf32>
    %22 = vector.broadcast %21 : vector<1x32xf32> to vector<8x32xf32>
    %23 = arith.addf %20, %22 : vector<8x32xf32>
    %24 = arith.truncf %8 : vector<16x32xf32> to vector<16x32xbf16>
    %c0_24 = arith.constant 0 : index
    %c0_25 = arith.constant 0 : index
    %25 = vector.load %arg11[%c0_24, %c0_25] : memref<32x128xbf16, #tpu.memory_space<vmem>>, vector<32x128xbf16>
    %cst_26 = arith.constant dense<0.000000e+00> : vector<16x128xf32>
    %26 = tpu.matmul %24, %25, %cst_26 {dimension_numbers = #tpu.dot_dimension_numbers<[1], [0], [0], [1], [0, 0, 1, 1], [], []>} : vector<16x32xbf16>, vector<32x128xbf16>, vector<16x128xf32> -> vector<16x128xf32>
    %c0_27 = arith.constant 0 : index
    %c0_28 = arith.constant 0 : index
    %27 = vector.load %arg14[%c0_27, %c0_28] : memref<1x128xf32, #tpu.memory_space<vmem>>, vector<1x128xf32>
    %28 = vector.broadcast %27 : vector<1x128xf32> to vector<16x128xf32>
    %29 = arith.addf %26, %28 : vector<16x128xf32>
    %30 = arith.truncf %18 : vector<8x32xf32> to vector<8x32xbf16>
    %c0_29 = arith.constant 0 : index
    %c0_30 = arith.constant 0 : index
    %31 = vector.load %arg12[%c0_29, %c0_30] : memref<32x128xbf16, #tpu.memory_space<vmem>>, vector<32x128xbf16>
    %cst_31 = arith.constant dense<0.000000e+00> : vector<8x128xf32>
    %32 = tpu.matmul %30, %31, %cst_31 {dimension_numbers = #tpu.dot_dimension_numbers<[1], [0], [0], [1], [0, 0, 1, 1], [], []>} : vector<8x32xbf16>, vector<32x128xbf16>, vector<8x128xf32> -> vector<8x128xf32>
    %33 = vector.shape_cast %13 : vector<16x32xf32> to vector<2x8x1x32xf32>
    %34 = vector.shape_cast %23 : vector<8x32xf32> to vector<2x1x4x32xf32>
    %35 = vector.broadcast %33 : vector<2x8x1x32xf32> to vector<2x8x4x32xf32>
    %36 = vector.broadcast %34 : vector<2x1x4x32xf32> to vector<2x8x4x32xf32>
    %37 = arith.mulf %35, %36 : vector<2x8x4x32xf32>
    %38 = vector.shape_cast %37 : vector<2x8x4x32xf32> to vector<64x32xf32>
    %39 = arith.truncf %38 : vector<64x32xf32> to vector<64x32xbf16>
    %c0_32 = arith.constant 0 : index
    %c0_33 = arith.constant 0 : index
    %40 = vector.load %arg13[%c0_32, %c0_33] : memref<32x128xbf16, #tpu.memory_space<vmem>>, vector<32x128xbf16>
    %cst_34 = arith.constant dense<0.000000e+00> : vector<64x128xf32>
    %41 = tpu.matmul %39, %40, %cst_34 {dimension_numbers = #tpu.dot_dimension_numbers<[1], [0], [0], [1], [0, 0, 1, 1], [], []>} : vector<64x32xbf16>, vector<32x128xbf16>, vector<64x128xf32> -> vector<64x128xf32>
    %42 = vector.shape_cast %41 : vector<64x128xf32> to vector<2x8x4x128xf32>
    %43 = vector.shape_cast %29 : vector<16x128xf32> to vector<2x8x1x128xf32>
    %44 = vector.broadcast %43 : vector<2x8x1x128xf32> to vector<2x8x4x128xf32>
    %45 = arith.addf %42, %44 : vector<2x8x4x128xf32>
    %46 = vector.shape_cast %32 : vector<8x128xf32> to vector<2x1x4x128xf32>
    %47 = vector.broadcast %46 : vector<2x1x4x128xf32> to vector<2x8x4x128xf32>
    %48 = arith.addf %45, %47 : vector<2x8x4x128xf32>
    %cst_35 = arith.constant 0.000000e+00 : f32
    %49 = vector.broadcast %cst_35 : f32 to vector<2x8x4x128xf32>
    %50 = arith.maximumf %48, %49 : vector<2x8x4x128xf32>
    %51 = vector.shape_cast %50 : vector<2x8x4x128xf32> to vector<64x128xf32>
    %52 = arith.truncf %51 : vector<64x128xf32> to vector<64x128xbf16>
    %c0_36 = arith.constant 0 : index
    %c0_37 = arith.constant 0 : index
    %53 = vector.load %arg15[%c0_36, %c0_37] : memref<128x3xbf16, #tpu.memory_space<vmem>>, vector<128x3xbf16>
    %cst_38 = arith.constant dense<0.000000e+00> : vector<64x3xf32>
    %54 = tpu.matmul %52, %53, %cst_38 {dimension_numbers = #tpu.dot_dimension_numbers<[1], [0], [0], [1], [0, 0, 1, 1], [], []>} : vector<64x128xbf16>, vector<128x3xbf16>, vector<64x3xf32> -> vector<64x3xf32>
    %c0_39 = arith.constant 0 : index
    %c0_40 = arith.constant 0 : index
    %55 = vector.load %arg16[%c0_39, %c0_40] : memref<1x3xf32, #tpu.memory_space<vmem>>, vector<1x3xf32>
    %56 = vector.broadcast %55 : vector<1x3xf32> to vector<64x3xf32>
    %57 = arith.addf %54, %56 : vector<64x3xf32>
    %58 = vector.shape_cast %57 : vector<64x3xf32> to vector<2x8x4x3xf32>
    %c0_41 = arith.constant 0 : index
    %c0_42 = arith.constant 0 : index
    %c0_43 = arith.constant 0 : index
    %c0_44 = arith.constant 0 : index
    %59 = vector.load %arg17[%c0_41, %c0_42, %c0_43, %c0_44] : memref<2x8x4x3xf32, #tpu.memory_space<vmem>>, vector<2x8x4x3xf32>
    tpu.vector_store %arg17[%c0_41, %c0_42, %c0_43, %c0_44], %58 {strides = array<i32>} : memref<2x8x4x3xf32, #tpu.memory_space<vmem>>, vector<2x8x4x3xf32>,
    return
  }
  func.func @transform_0(%arg0: i32) -> (i32, i32, i32) {
    %c0_i32 = arith.constant 0 : i32
    %c0_i32_0 = arith.constant 0 : i32
    %c0_i32_1 = arith.constant 0 : i32
    return %arg0, %c0_i32, %c0_i32_0 : i32, i32, i32
  }
  func.func @transform_1(%arg0: i32) -> (i32, i32, i32) {
    %c0_i32 = arith.constant 0 : i32
    %c0_i32_0 = arith.constant 0 : i32
    %c0_i32_1 = arith.constant 0 : i32
    return %arg0, %c0_i32, %c0_i32_0 : i32, i32, i32
  }
  func.func @transform_2(%arg0: i32) -> (i32, i32) {
    %c0_i32 = arith.constant 0 : i32
    %c0_i32_0 = arith.constant 0 : i32
    %c0_i32_1 = arith.constant 0 : i32
    return %c0_i32, %c0_i32_0 : i32, i32
  }
  func.func @transform_3(%arg0: i32) -> (i32, i32) {
    %c0_i32 = arith.constant 0 : i32
    %c0_i32_0 = arith.constant 0 : i32
    %c0_i32_1 = arith.constant 0 : i32
    return %c0_i32, %c0_i32_0 : i32, i32
  }
  func.func @transform_4(%arg0: i32) -> (i32, i32) {
    %c0_i32 = arith.constant 0 : i32
    %c0_i32_0 = arith.constant 0 : i32
    %c0_i32_1 = arith.constant 0 : i32
    return %c0_i32, %c0_i32_0 : i32, i32
  }
  func.func @transform_5(%arg0: i32) -> (i32, i32) {
    %c0_i32 = arith.constant 0 : i32
    %c0_i32_0 = arith.constant 0 : i32
    %c0_i32_1 = arith.constant 0 : i32
    return %c0_i32, %c0_i32_0 : i32, i32
  }
  func.func @transform_6(%arg0: i32) -> (i32, i32) {
    %c0_i32 = arith.constant 0 : i32
    %c0_i32_0 = arith.constant 0 : i32
    %c0_i32_1 = arith.constant 0 : i32
    return %c0_i32, %c0_i32_0 : i32, i32
  }
  func.func @transform_7(%arg0: i32) -> (i32, i32) {
    %c0_i32 = arith.constant 0 : i32
    %c0_i32_0 = arith.constant 0 : i32
    %c0_i32_1 = arith.constant 0 : i32
    return %c0_i32, %c0_i32_0 : i32, i32
  }
  func.func @transform_8(%arg0: i32) -> (i32, i32) {
    %c0_i32 = arith.constant 0 : i32
    %c0_i32_0 = arith.constant 0 : i32
    %c0_i32_1 = arith.constant 0 : i32
    return %c0_i32, %c0_i32_0 : i32, i32
  }
  func.func @transform_9(%arg0: i32) -> (i32, i32) {
    %c0_i32 = arith.constant 0 : i32
    %c0_i32_0 = arith.constant 0 : i32
    %c0_i32_1 = arith.constant 0 : i32
    return %c0_i32, %c0_i32_0 : i32, i32
  }
  func.func @transform_10(%arg0: i32) -> (i32, i32) {
    %c0_i32 = arith.constant 0 : i32
    %c0_i32_0 = arith.constant 0 : i32
    %c0_i32_1 = arith.constant 0 : i32
    return %c0_i32, %c0_i32_0 : i32, i32
  }
  func.func @transform_11(%arg0: i32) -> (i32, i32) {
    %c0_i32 = arith.constant 0 : i32
    %c0_i32_0 = arith.constant 0 : i32
    %c0_i32_1 = arith.constant 0 : i32
    return %c0_i32, %c0_i32_0 : i32, i32
  }
  func.func @transform_12(%arg0: i32) -> (i32, i32) {
    %c0_i32 = arith.constant 0 : i32
    %c0_i32_0 = arith.constant 0 : i32
    %c0_i32_1 = arith.constant 0 : i32
    return %c0_i32, %c0_i32_0 : i32, i32
  }
  func.func @transform_13(%arg0: i32) -> (i32, i32) {
    %c0_i32 = arith.constant 0 : i32
    %c0_i32_0 = arith.constant 0 : i32
    %c0_i32_1 = arith.constant 0 : i32
    return %c0_i32, %c0_i32_0 : i32, i32
  }
  func.func @transform_14(%arg0: i32) -> (i32, i32) {
    %c0_i32 = arith.constant 0 : i32
    %c0_i32_0 = arith.constant 0 : i32
    %c0_i32_1 = arith.constant 0 : i32
    return %c0_i32, %c0_i32_0 : i32, i32
  }
  func.func @transform_15(%arg0: i32) -> (i32, i32) {
    %c0_i32 = arith.constant 0 : i32
    %c0_i32_0 = arith.constant 0 : i32
    %c0_i32_1 = arith.constant 0 : i32
    return %c0_i32, %c0_i32_0 : i32, i32
  }
  func.func @transform_16(%arg0: i32) -> (i32, i32, i32, i32) {
    %c0_i32 = arith.constant 0 : i32
    %c0_i32_0 = arith.constant 0 : i32
    %c0_i32_1 = arith.constant 0 : i32
    %c0_i32_2 = arith.constant 0 : i32
    return %arg0, %c0_i32, %c0_i32_0, %c0_i32_1 : i32, i32, i32, i32
  }
}

module attributes {stable_mosaic.version = 11 : i64} {
  func.func @scorer_kernel(%arg0: i32, %arg1: memref<2x8x32xbf16, #tpu.memory_space<vmem>>, %arg2: memref<2x4x32xbf16, #tpu.memory_space<vmem>>, %arg3: memref<32x32xbf16, #tpu.memory_space<vmem>>, %arg4: memref<32x32xbf16, #tpu.memory_space<vmem>>, %arg5: memref<1x32xf32, #tpu.memory_space<vmem>>, %arg6: memref<1x32xf32, #tpu.memory_space<vmem>>, %arg7: memref<32x32xbf16, #tpu.memory_space<vmem>>, %arg8: memref<32x32xbf16, #tpu.memory_space<vmem>>, %arg9: memref<1x32xf32, #tpu.memory_space<vmem>>, %arg10: memref<1x32xf32, #tpu.memory_space<vmem>>, %arg11: memref<32x128xbf16, #tpu.memory_space<vmem>>, %arg12: memref<32x128xbf16, #tpu.memory_space<vmem>>, %arg13: memref<32x128xbf16, #tpu.memory_space<vmem>>, %arg14: memref<1x128xf32, #tpu.memory_space<vmem>>, %arg15: memref<128x3xbf16, #tpu.memory_space<vmem>>, %arg16: memref<1x3xf32, #tpu.memory_space<vmem>>, %arg17: memref<2x8x4x3xf32, #tpu.memory_space<vmem>>) attributes {dimension_semantics = [#tpu.dimension_semantics<parallel>], iteration_bounds = array<i64: 1>, scalar_prefetch = 0 : i64, scratch_operands = 0 : i64, tpu.core_type = #tpu.core_type<tc>, window_params = [{transform_indices = @transform_0, window_bounds = array<i64: 2, 8, 32>}, {transform_indices = @transform_1, window_bounds = array<i64: 2, 4, 32>}, {pipeline_mode = #tpu.pipeline_mode<synchronous>, transform_indices = @transform_2, window_bounds = array<i64: 32, 32>}, {pipeline_mode = #tpu.pipeline_mode<synchronous>, transform_indices = @transform_3, window_bounds = array<i64: 32, 32>}, {pipeline_mode = #tpu.pipeline_mode<synchronous>, transform_indices = @transform_4, window_bounds = array<i64: 1, 32>}, {pipeline_mode = #tpu.pipeline_mode<synchronous>, transform_indices = @transform_5, window_bounds = array<i64: 1, 32>}, {pipeline_mode = #tpu.pipeline_mode<synchronous>, transform_indices = @transform_6, window_bounds = array<i64: 32, 32>}, {pipeline_mode = #tpu.pipeline_mode<synchronous>, transform_indices = @transform_7, window_bounds = array<i64: 32, 32>}, {pipeline_mode = #tpu.pipeline_mode<synchronous>, transform_indices = @transform_8, window_bounds = array<i64: 1, 32>}, {pipeline_mode = #tpu.pipeline_mode<synchronous>, transform_indices = @transform_9, window_bounds = array<i64: 1, 32>}, {pipeline_mode = #tpu.pipeline_mode<synchronous>, transform_indices = @transform_10, window_bounds = array<i64: 32, 128>}, {pipeline_mode = #tpu.pipeline_mode<synchronous>, transform_indices = @transform_11, window_bounds = array<i64: 32, 128>}, {pipeline_mode = #tpu.pipeline_mode<synchronous>, transform_indices = @transform_12, window_bounds = array<i64: 32, 128>}, {pipeline_mode = #tpu.pipeline_mode<synchronous>, transform_indices = @transform_13, window_bounds = array<i64: 1, 128>}, {pipeline_mode = #tpu.pipeline_mode<synchronous>, transform_indices = @transform_14, window_bounds = array<i64: 128, 3>}, {pipeline_mode = #tpu.pipeline_mode<synchronous>, transform_indices = @transform_15, window_bounds = array<i64: 1, 3>}, {transform_indices = @transform_16, window_bounds = array<i64: 2, 8, 4, 3>}]} {
    %c0 = arith.constant 0 : index
    %c0_0 = arith.constant 0 : index
    %c0_1 = arith.constant 0 : index
    %0 = vector.load %arg1[%c0, %c0_0, %c0_1] : memref<2x8x32xbf16, #tpu.memory_space<vmem>>, vector<2x8x32xbf16>
    %1 = vector.shape_cast %0 : vector<2x8x32xbf16> to vector<16x32xbf16>
    %c0_2 = arith.constant 0 : index
    %c0_3 = arith.constant 0 : index
    %c0_4 = arith.constant 0 : index
    %2 = vector.load %arg2[%c0_2, %c0_3, %c0_4] : memref<2x4x32xbf16, #tpu.memory_space<vmem>>, vector<2x4x32xbf16>
    %3 = vector.shape_cast %2 : vector<2x4x32xbf16> to vector<8x32xbf16>
    %c0_5 = arith.constant 0 : index
    %c0_6 = arith.constant 0 : index
    %4 = vector.load %arg3[%c0_5, %c0_6] : memref<32x32xbf16, #tpu.memory_space<vmem>>, vector<32x32xbf16>
    %cst = arith.constant dense<0.000000e+00> : vector<16x32xf32>
    %5 = tpu.matmul %1, %4, %cst {dimension_numbers = #tpu.dot_dimension_numbers<[1], [0], [0], [1], [0, 0, 1, 1], [], []>} : vector<16x32xbf16>, vector<32x32xbf16>, vector<16x32xf32> -> vector<16x32xf32>
    %c0_7 = arith.constant 0 : index
    %c0_8 = arith.constant 0 : index
    %6 = vector.load %arg5[%c0_7, %c0_8] : memref<1x32xf32, #tpu.memory_space<vmem>>, vector<1x32xf32>
    %7 = vector.broadcast %6 : vector<1x32xf32> to vector<16x32xf32>
    %8 = arith.addf %5, %7 : vector<16x32xf32>
    %c0_9 = arith.constant 0 : index
    %c0_10 = arith.constant 0 : index
    %9 = vector.load %arg4[%c0_9, %c0_10] : memref<32x32xbf16, #tpu.memory_space<vmem>>, vector<32x32xbf16>
    %cst_11 = arith.constant dense<0.000000e+00> : vector<16x32xf32>
    %10 = tpu.matmul %1, %9, %cst_11 {dimension_numbers = #tpu.dot_dimension_numbers<[1], [0], [0], [1], [0, 0, 1, 1], [], []>} : vector<16x32xbf16>, vector<32x32xbf16>, vector<16x32xf32> -> vector<16x32xf32>
    %c0_12 = arith.constant 0 : index
    %c0_13 = arith.constant 0 : index
    %11 = vector.load %arg6[%c0_12, %c0_13] : memref<1x32xf32, #tpu.memory_space<vmem>>, vector<1x32xf32>
    %12 = vector.broadcast %11 : vector<1x32xf32> to vector<16x32xf32>
    %13 = arith.addf %10, %12 : vector<16x32xf32>
    %c0_14 = arith.constant 0 : index
    %c0_15 = arith.constant 0 : index
    %14 = vector.load %arg7[%c0_14, %c0_15] : memref<32x32xbf16, #tpu.memory_space<vmem>>, vector<32x32xbf16>
    %cst_16 = arith.constant dense<0.000000e+00> : vector<8x32xf32>
    %15 = tpu.matmul %3, %14, %cst_16 {dimension_numbers = #tpu.dot_dimension_numbers<[1], [0], [0], [1], [0, 0, 1, 1], [], []>} : vector<8x32xbf16>, vector<32x32xbf16>, vector<8x32xf32> -> vector<8x32xf32>
    %c0_17 = arith.constant 0 : index
    %c0_18 = arith.constant 0 : index
    %16 = vector.load %arg9[%c0_17, %c0_18] : memref<1x32xf32, #tpu.memory_space<vmem>>, vector<1x32xf32>
    %17 = vector.broadcast %16 : vector<1x32xf32> to vector<8x32xf32>
    %18 = arith.addf %15, %17 : vector<8x32xf32>
    %c0_19 = arith.constant 0 : index
    %c0_20 = arith.constant 0 : index
    %19 = vector.load %arg8[%c0_19, %c0_20] : memref<32x32xbf16, #tpu.memory_space<vmem>>, vector<32x32xbf16>
    %cst_21 = arith.constant dense<0.000000e+00> : vector<8x32xf32>
    %20 = tpu.matmul %3, %19, %cst_21 {dimension_numbers = #tpu.dot_dimension_numbers<[1], [0], [0], [1], [0, 0, 1, 1], [], []>} : vector<8x32xbf16>, vector<32x32xbf16>, vector<8x32xf32> -> vector<8x32xf32>
    %c0_22 = arith.constant 0 : index
    %c0_23 = arith.constant 0 : index
    %21 = vector.load %arg10[%c0_22, %c0_23] : memref<1x32xf32, #tpu.memory_space<vmem>>, vector<1x32xf32>
    %22 = vector.broadcast %21 : vector<1x32xf32> to vector<8x32xf32>
    %23 = arith.addf %20, %22 : vector<8x32xf32>
    %24 = arith.truncf %8 : vector<16x32xf32> to vector<16x32xbf16>
    %c0_24 = arith.constant 0 : index
    %c0_25 = arith.constant 0 : index
    %25 = vector.load %arg11[%c0_24, %c0_25] : memref<32x128xbf16, #tpu.memory_space<vmem>>, vector<32x128xbf16>
    %cst_26 = arith.constant dense<0.000000e+00> : vector<16x128xf32>
    %26 = tpu.matmul %24, %25, %cst_26 {dimension_numbers = #tpu.dot_dimension_numbers<[1], [0], [0], [1], [0, 0, 1, 1], [], []>} : vector<16x32xbf16>, vector<32x128xbf16>, vector<16x128xf32> -> vector<16x128xf32>
    %c0_27 = arith.constant 0 : index
    %c0_28 = arith.constant 0 : index
    %27 = vector.load %arg14[%c0_27, %c0_28] : memref<1x128xf32, #tpu.memory_space<vmem>>, vector<1x128xf32>
    %28 = vector.broadcast %27 : vector<1x128xf32> to vector<16x128xf32>
    %29 = arith.addf %26, %28 : vector<16x128xf32>
    %30 = arith.truncf %18 : vector<8x32xf32> to vector<8x32xbf16>
    %c0_29 = arith.constant 0 : index
    %c0_30 = arith.constant 0 : index
    %31 = vector.load %arg12[%c0_29, %c0_30] : memref<32x128xbf16, #tpu.memory_space<vmem>>, vector<32x128xbf16>
    %cst_31 = arith.constant dense<0.000000e+00> : vector<8x128xf32>
    %32 = tpu.matmul %30, %31, %cst_31 {dimension_numbers = #tpu.dot_dimension_numbers<[1], [0], [0], [1], [0, 0, 1, 1], [], []>} : vector<8x32xbf16>, vector<32x128xbf16>, vector<8x128xf32> -> vector<8x128xf32>
    %33 = vector.shape_cast %13 : vector<16x32xf32> to vector<2x8x1x32xf32>
    %34 = vector.shape_cast %23 : vector<8x32xf32> to vector<2x1x4x32xf32>
    %35 = vector.broadcast %33 : vector<2x8x1x32xf32> to vector<2x8x4x32xf32>
    %36 = vector.broadcast %34 : vector<2x1x4x32xf32> to vector<2x8x4x32xf32>
    %37 = arith.mulf %35, %36 : vector<2x8x4x32xf32>
    %38 = vector.shape_cast %37 : vector<2x8x4x32xf32> to vector<64x32xf32>
    %39 = arith.truncf %38 : vector<64x32xf32> to vector<64x32xbf16>
    %c0_32 = arith.constant 0 : index
    %c0_33 = arith.constant 0 : index
    %40 = vector.load %arg13[%c0_32, %c0_33] : memref<32x128xbf16, #tpu.memory_space<vmem>>, vector<32x128xbf16>
    %cst_34 = arith.constant dense<0.000000e+00> : vector<64x128xf32>
    %41 = tpu.matmul %39, %40, %cst_34 {dimension_numbers = #tpu.dot_dimension_numbers<[1], [0], [0], [1], [0, 0, 1, 1], [], []>} : vector<64x32xbf16>, vector<32x128xbf16>, vector<64x128xf32> -> vector<64x128xf32>
    %42 = vector.shape_cast %41 : vector<64x128xf32> to vector<2x8x4x128xf32>
    %43 = vector.shape_cast %29 : vector<16x128xf32> to vector<2x8x1x128xf32>
    %44 = vector.broadcast %43 : vector<2x8x1x128xf32> to vector<2x8x4x128xf32>
    %45 = arith.addf %42, %44 : vector<2x8x4x128xf32>
    %46 = vector.shape_cast %32 : vector<8x128xf32> to vector<2x1x4x128xf32>
    %47 = vector.broadcast %46 : vector<2x1x4x128xf32> to vector<2x8x4x128xf32>
    %48 = arith.addf %45, %47 : vector<2x8x4x128xf32>
    %cst_35 = arith.constant 0.000000e+00 : f32
    %49 = vector.broadcast %cst_35 : f32 to vector<2x8x4x128xf32>
    %50 = arith.maximumf %48, %49 : vector<2x8x4x128xf32>
    %51 = vector.shape_cast %50 : vector<2x8x4x128xf32> to vector<64x128xf32>
    %52 = arith.truncf %51 : vector<64x128xf32> to vector<64x128xbf16>
    %c0_36 = arith.constant 0 : index
    %c0_37 = arith.constant 0 : index
    %53 = vector.load %arg15[%c0_36, %c0_37] : memref<128x3xbf16, #tpu.memory_space<vmem>>, vector<128x3xbf16>
    %cst_38 = arith.constant dense<0.000000e+00> : vector<64x3xf32>
    %54 = tpu.matmul %52, %53, %cst_38 {dimension_numbers = #tpu.dot_dimension_numbers<[1], [0], [0], [1], [0, 0, 1, 1], [], []>} : vector<64x128xbf16>, vector<128x3xbf16>, vector<64x3xf32> -> vector<64x3xf32>
    %c0_39 = arith.constant 0 : index
    %c0_40 = arith.constant 0 : index
    %55 = vector.load %arg16[%c0_39, %c0_40] : memref<1x3xf32, #tpu.memory_space<vmem>>, vector<1x3xf32>
    %56 = vector.broadcast %55 : vector<1x3xf32> to vector<64x3xf32>
    %57 = arith.addf %54, %56 : vector<64x3xf32>
    %58 = vector.shape_cast %57 : vector<64x3xf32> to vector<2x8x4x3xf32>
    %c0_41 = arith.constant 0 : index
    %c0_42 = arith.constant 0 : index
    %c0_43 = arith.constant 0 : index
    %c0_44 = arith.constant 0 : index
    %59 = vector.load %arg17[%c0_41, %c0_42, %c0_43, %c0_44] : memref<2x8x4x3xf32, #tpu.memory_space<vmem>>, vector<2x8x4x3xf32>
    tpu.vector_store %arg17[%c0_41, %c0_42, %c0_43, %c0_44], %58 {strides = array<i32>} : memref<2x8x4x3xf32, #tpu.memory_space<vmem>>, vector<2x8x4x3xf32>,
    return
  }
  func.func @transform_0(%arg0: i32) -> (i32, i32, i32) {
    %c0_i32 = arith.constant 0 : i32
    %c0_i32_0 = arith.constant 0 : i32
    %c0_i32_1 = arith.constant 0 : i32
    return %arg0, %c0_i32, %c0_i32_0 : i32, i32, i32
  }
  func.func @transform_1(%arg0: i32) -> (i32, i32, i32) {
    %c0_i32 = arith.constant 0 : i32
    %c0_i32_0 = arith.constant 0 : i32
    %c0_i32_1 = arith.constant 0 : i32
    return %arg0, %c0_i32, %c0_i32_0 : i32, i32, i32
  }
  func.func @transform_2(%arg0: i32) -> (i32, i32) {
    %c0_i32 = arith.constant 0 : i32
    %c0_i32_0 = arith.constant 0 : i32
    %c0_i32_1 = arith.constant 0 : i32
    return %c0_i32, %c0_i32_0 : i32, i32
  }
  func.func @transform_3(%arg0: i32) -> (i32, i32) {
    %c0_i32 = arith.constant 0 : i32
    %c0_i32_0 = arith.constant 0 : i32
    %c0_i32_1 = arith.constant 0 : i32
    return %c0_i32, %c0_i32_0 : i32, i32
  }
  func.func @transform_4(%arg0: i32) -> (i32, i32) {
    %c0_i32 = arith.constant 0 : i32
    %c0_i32_0 = arith.constant 0 : i32
    %c0_i32_1 = arith.constant 0 : i32
    return %c0_i32, %c0_i32_0 : i32, i32
  }
  func.func @transform_5(%arg0: i32) -> (i32, i32) {
    %c0_i32 = arith.constant 0 : i32
    %c0_i32_0 = arith.constant 0 : i32
    %c0_i32_1 = arith.constant 0 : i32
    return %c0_i32, %c0_i32_0 : i32, i32
  }
  func.func @transform_6(%arg0: i32) -> (i32, i32) {
    %c0_i32 = arith.constant 0 : i32
    %c0_i32_0 = arith.constant 0 : i32
    %c0_i32_1 = arith.constant 0 : i32
    return %c0_i32, %c0_i32_0 : i32, i32
  }
  func.func @transform_7(%arg0: i32) -> (i32, i32) {
    %c0_i32 = arith.constant 0 : i32
    %c0_i32_0 = arith.constant 0 : i32
    %c0_i32_1 = arith.constant 0 : i32
    return %c0_i32, %c0_i32_0 : i32, i32
  }
  func.func @transform_8(%arg0: i32) -> (i32, i32) {
    %c0_i32 = arith.constant 0 : i32
    %c0_i32_0 = arith.constant 0 : i32
    %c0_i32_1 = arith.constant 0 : i32
    return %c0_i32, %c0_i32_0 : i32, i32
  }
  func.func @transform_9(%arg0: i32) -> (i32, i32) {
    %c0_i32 = arith.constant 0 : i32
    %c0_i32_0 = arith.constant 0 : i32
    %c0_i32_1 = arith.constant 0 : i32
    return %c0_i32, %c0_i32_0 : i32, i32
  }
  func.func @transform_10(%arg0: i32) -> (i32, i32) {
    %c0_i32 = arith.constant 0 : i32
    %c0_i32_0 = arith.constant 0 : i32
    %c0_i32_1 = arith.constant 0 : i32
    return %c0_i32, %c0_i32_0 : i32, i32
  }
  func.func @transform_11(%arg0: i32) -> (i32, i32) {
    %c0_i32 = arith.constant 0 : i32
    %c0_i32_0 = arith.constant 0 : i32
    %c0_i32_1 = arith.constant 0 : i32
    return %c0_i32, %c0_i32_0 : i32, i32
  }
  func.func @transform_12(%arg0: i32) -> (i32, i32) {
    %c0_i32 = arith.constant 0 : i32
    %c0_i32_0 = arith.constant 0 : i32
    %c0_i32_1 = arith.constant 0 : i32
    return %c0_i32, %c0_i32_0 : i32, i32
  }
  func.func @transform_13(%arg0: i32) -> (i32, i32) {
    %c0_i32 = arith.constant 0 : i32
    %c0_i32_0 = arith.constant 0 : i32
    %c0_i32_1 = arith.constant 0 : i32
    return %c0_i32, %c0_i32_0 : i32, i32
  }
  func.func @transform_14(%arg0: i32) -> (i32, i32) {
    %c0_i32 = arith.constant 0 : i32
    %c0_i32_0 = arith.constant 0 : i32
    %c0_i32_1 = arith.constant 0 : i32
    return %c0_i32, %c0_i32_0 : i32, i32
  }
  func.func @transform_15(%arg0: i32) -> (i32, i32) {
    %c0_i32 = arith.constant 0 : i32
    %c0_i32_0 = arith.constant 0 : i32
    %c0_i32_1 = arith.constant 0 : i32
    return %c0_i32, %c0_i32_0 : i32, i32
  }
  func.func @transform_16(%arg0: i32) -> (i32, i32, i32, i32) {
    %c0_i32 = arith.constant 0 : i32
    %c0_i32_0 = arith.constant 0 : i32
    %c0_i32_1 = arith.constant 0 : i32
    %c0_i32_2 = arith.constant 0 : i32
    return %arg0, %c0_i32, %c0_i32_0, %c0_i32_1 : i32, i32, i32, i32
  }
}

</mosaic_0001>

<llo_original>
// kernel: tpu_custom_call.1
$region0: #{tpu_custom_call.1}
  #allocation0 [shape = 'u32[]', space=smem, size = 0x4, offset = 0x4, fixed_abs, tag = 'smem constant byte address 0x4 - core index']
  #allocation1 [shape = 'u32[72,128]{1,0:T(1,128)}', space=vmem, size = 0x9000, scoped, tag = 'internal scratch']
  %s0 = inlined_call_operand.hbm [shape: bf16[2,8,32], index: 0, kind: input, shape index: {}]
  %s1 = inlined_call_operand.hbm [shape: bf16[2,4,32], index: 1, kind: input, shape index: {}]
  %s2 = inlined_call_operand.vmem [shape: bf16[32,32], index: 2, kind: input, shape index: {}]
  %s3 = inlined_call_operand.vmem [shape: bf16[32,32], index: 3, kind: input, shape index: {}]
  %s4 = inlined_call_operand.vmem [shape: f32[1,32], index: 4, kind: input, shape index: {}]
  %s5 = inlined_call_operand.vmem [shape: f32[1,32], index: 5, kind: input, shape index: {}]
  %s6 = inlined_call_operand.vmem [shape: bf16[32,32], index: 6, kind: input, shape index: {}]
  %s7 = inlined_call_operand.vmem [shape: bf16[32,32], index: 7, kind: input, shape index: {}]
  %s8 = inlined_call_operand.vmem [shape: f32[1,32], index: 8, kind: input, shape index: {}]
  %s9 = inlined_call_operand.vmem [shape: f32[1,32], index: 9, kind: input, shape index: {}]
  %s10 = inlined_call_operand.hbm [shape: bf16[32,128], index: 10, kind: input, shape index: {}]
  %s11 = inlined_call_operand.hbm [shape: bf16[32,128], index: 11, kind: input, shape index: {}]
  %s12 = inlined_call_operand.hbm [shape: bf16[32,128], index: 12, kind: input, shape index: {}]
  %s13 = inlined_call_operand.vmem [shape: f32[1,128], index: 13, kind: input, shape index: {}]
  %s14 = inlined_call_operand.vmem [shape: bf16[128,3], index: 14, kind: input, shape index: {}]
  %s15 = inlined_call_operand.vmem [shape: f32[1,3], index: 15, kind: input, shape index: {}]
  %s16 = inlined_call_operand.vmem [shape: f32[2,8,4,3], index: 16, kind: output, shape index: {}]
  %s17 = sld [smem:[#allocation0]]
  $region94: #{tpu_custom_call.1} parent=0
    _
  %s19 = ssub.s32 1, %s17
  %s20 = scalar_select 0, %s19, %s17
  $region1: #{tpu_custom_call.1} parent=0
    #allocation2 [shape = 'u8[4096]{0}', space=vmem, size = 0x1000, scoped, tag = 'input window, operand 0, single buffered']
    #allocation3 [shape = 's32[1]{0}', space=sflag, size = 0x4, scoped, tag = 'scoped memory for tpu_custom_call.1']
    #allocation4 [shape = 'u8[2048]{0}', space=vmem, size = 0x800, scoped, tag = 'input window, operand 1, single buffered']
    #allocation5 [shape = 's32[1]{0}', space=sflag, size = 0x4, scoped, tag = 'scoped memory for tpu_custom_call.1']
    #allocation6 [shape = 'u8[8192]{0}', space=vmem, size = 0x2000, scoped, tag = 'input window, operand 10, single buffered']
    #allocation7 [shape = 'u8[8192]{0}', space=vmem, size = 0x2000, scoped, tag = 'input window, operand 11, single buffered']
    #allocation8 [shape = 's32[1]{0}', space=sflag, size = 0x4, scoped, tag = 'scoped memory for tpu_custom_call.1']
    #allocation9 [shape = 'u8[8192]{0}', space=vmem, size = 0x2000, scoped, tag = 'input window, operand 12, single buffered']
    %21 = vsyncpa [#allocation3], 0
    %22 = vsyncpa [#allocation5], 0
    %23 = vsyncpa [#allocation8], 0
    // Predicated region
    $region2: #{tpu_custom_call.1} parent=1 // pred_check
      _
    $region3: #{tpu_custom_call.1} parent=1 // pred_check_branch
      %25 = sbr.rel (0) target = $region5
    $region4: #{tpu_custom_call.1} parent=1 // pred_region
      %27 = vsyncadd [#allocation3], 0
      %s28 = sshll.u32 %s0, 4
      %s29 = int_to_ptr.hbm [resolvable:$true] %s28
      %s30 = sshll.u32 [#allocation2], 4
      %s31 = int_to_ptr.vmem [resolvable:$true] %s30
      %36 = dma.hbm_to_vmem [thread:$0]  %s29, 128, %s31, [#allocation3], 64, 64, 4
    $region5: #{tpu_custom_call.1} parent=1 // pred_fallthru
      _
    // Predicated region
    $region6: #{tpu_custom_call.1} parent=1 // pred_check
      _
    $region7: #{tpu_custom_call.1} parent=1 // pred_check_branch
      %38 = sbr.rel (0) target = $region9
    $region8: #{tpu_custom_call.1} parent=1 // pred_region
      %40 = vsyncadd [#allocation5], 0
      %s41 = sshll.u32 %s1, 4
      %s42 = int_to_ptr.hbm [resolvable:$true] %s41
      %s43 = sshll.u32 [#allocation4], 4
      %s44 = int_to_ptr.vmem [resolvable:$true] %s43
      %49 = dma.hbm_to_vmem [thread:$0]  %s42, 64, %s44, [#allocation5], 32, 32, 2
    $region9: #{tpu_custom_call.1} parent=1 // pred_fallthru
      _
    // Predicated region
    $region10: #{tpu_custom_call.1} parent=1 // pred_check
      _
    $region11: #{tpu_custom_call.1} parent=1 // pred_check_branch
      %51 = sbr.rel (0) target = $region13
    $region12: #{tpu_custom_call.1} parent=1 // pred_region
      _
    $region13: #{tpu_custom_call.1} parent=1 // pred_fallthru
      _
    // Predicated region
    $region14: #{tpu_custom_call.1} parent=1 // pred_check
      _
    $region15: #{tpu_custom_call.1} parent=1 // pred_check_branch
      %53 = sbr.rel (0) target = $region17
    $region16: #{tpu_custom_call.1} parent=1 // pred_region
      _
    $region17: #{tpu_custom_call.1} parent=1 // pred_fallthru
      _
    // Predicated region
    $region18: #{tpu_custom_call.1} parent=1 // pred_check
      _
    $region19: #{tpu_custom_call.1} parent=1 // pred_check_branch
      %55 = sbr.rel (0) target = $region21
    $region20: #{tpu_custom_call.1} parent=1 // pred_region
      _
    $region21: #{tpu_custom_call.1} parent=1 // pred_fallthru
      _
    // Predicated region
    $region22: #{tpu_custom_call.1} parent=1 // pred_check
      _
    $region23: #{tpu_custom_call.1} parent=1 // pred_check_branch
      %57 = sbr.rel (0) target = $region25
    $region24: #{tpu_custom_call.1} parent=1 // pred_region
      _
    $region25: #{tpu_custom_call.1} parent=1 // pred_fallthru
      _
    // Predicated region
    $region26: #{tpu_custom_call.1} parent=1 // pred_check
      _
    $region27: #{tpu_custom_call.1} parent=1 // pred_check_branch
      %59 = sbr.rel (0) target = $region29
    $region28: #{tpu_custom_call.1} parent=1 // pred_region
      _
    $region29: #{tpu_custom_call.1} parent=1 // pred_fallthru
      _
    // Predicated region
    $region30: #{tpu_custom_call.1} parent=1 // pred_check
      _
    $region31: #{tpu_custom_call.1} parent=1 // pred_check_branch
      %61 = sbr.rel (0) target = $region33
    $region32: #{tpu_custom_call.1} parent=1 // pred_region
      _
    $region33: #{tpu_custom_call.1} parent=1 // pred_fallthru
      _
    // Predicated region
    $region34: #{tpu_custom_call.1} parent=1 // pred_check
      _
    $region35: #{tpu_custom_call.1} parent=1 // pred_check_branch
      %63 = sbr.rel (0) target = $region37
    $region36: #{tpu_custom_call.1} parent=1 // pred_region
      _
    $region37: #{tpu_custom_call.1} parent=1 // pred_fallthru
      _
    // Predicated region
    $region38: #{tpu_custom_call.1} parent=1 // pred_check
      _
    $region39: #{tpu_custom_call.1} parent=1 // pred_check_branch
      %65 = sbr.rel (0) target = $region41
    $region40: #{tpu_custom_call.1} parent=1 // pred_region
      _
    $region41: #{tpu_custom_call.1} parent=1 // pred_fallthru
      _
    // Predicated region
    $region42: #{tpu_custom_call.1} parent=1 // pred_check
      _
    $region43: #{tpu_custom_call.1} parent=1 // pred_check_branch
      %67 = sbr.rel (0) target = $region45
    $region44: #{tpu_custom_call.1} parent=1 // pred_region
      %69 = vsyncadd [#allocation5], 0
      %s70 = sshll.u32 %s10, 4
      %s71 = int_to_ptr.hbm [resolvable:$true] %s70
      %s72 = sshll.u32 [#allocation6], 4
      %s73 = int_to_ptr.vmem [resolvable:$true] %s72
      %78 = dma.hbm_to_vmem [thread:$0]  %s71, 256, %s73, [#allocation5], 64, 64, 4
    $region45: #{tpu_custom_call.1} parent=1 // pred_fallthru
      _
    // Predicated region
    $region46: #{tpu_custom_call.1} parent=1 // pred_check
      _
    $region47: #{tpu_custom_call.1} parent=1 // pred_check_branch
      %80 = sbr.rel (0) target = $region49
    $region48: #{tpu_custom_call.1} parent=1 // pred_region
      %82 = vsyncadd [#allocation8], 0
      %s83 = sshll.u32 %s11, 4
      %s84 = int_to_ptr.hbm [resolvable:$true] %s83
      %s85 = sshll.u32 [#allocation7], 4
      %s86 = int_to_ptr.vmem [resolvable:$true] %s85
      %91 = dma.hbm_to_vmem [thread:$0]  %s84, 256, %s86, [#allocation8], 64, 64, 4
    $region49: #{tpu_custom_call.1} parent=1 // pred_fallthru
      _
    // Predicated region
    $region50: #{tpu_custom_call.1} parent=1 // pred_check
      _
    $region51: #{tpu_custom_call.1} parent=1 // pred_check_branch
      %93 = sbr.rel (0) target = $region53
    $region52: #{tpu_custom_call.1} parent=1 // pred_region
      %95 = vsyncadd [#allocation8], 0
      %s96 = sshll.u32 %s12, 4
      %s97 = int_to_ptr.hbm [resolvable:$true] %s96
      %s98 = sshll.u32 [#allocation9], 4
      %s99 = int_to_ptr.vmem [resolvable:$true] %s98
      %104 = dma.hbm_to_vmem [thread:$0]  %s97, 256, %s99, [#allocation8], 64, 64, 4
    $region53: #{tpu_custom_call.1} parent=1 // pred_fallthru
      _
    // Predicated region
    $region54: #{tpu_custom_call.1} parent=1 // pred_check
      _
    $region55: #{tpu_custom_call.1} parent=1 // pred_check_branch
      %106 = sbr.rel (0) target = $region57
    $region56: #{tpu_custom_call.1} parent=1 // pred_region
      _
    $region57: #{tpu_custom_call.1} parent=1 // pred_fallthru
      _
    // Predicated region
    $region58: #{tpu_custom_call.1} parent=1 // pred_check
      _
    $region59: #{tpu_custom_call.1} parent=1 // pred_check_branch
      %108 = sbr.rel (0) target = $region61
    $region60: #{tpu_custom_call.1} parent=1 // pred_region
      _
    $region61: #{tpu_custom_call.1} parent=1 // pred_fallthru
      _
    // Predicated region
    $region62: #{tpu_custom_call.1} parent=1 // pred_check
      _
    $region63: #{tpu_custom_call.1} parent=1 // pred_check_branch
      %110 = sbr.rel (0) target = $region65
    $region64: #{tpu_custom_call.1} parent=1 // pred_region
      _
    $region65: #{tpu_custom_call.1} parent=1 // pred_fallthru
      _
    // Predicated region
    $region66: #{tpu_custom_call.1} parent=1 // pred_check
      _
    $region67: #{tpu_custom_call.1} parent=1 // pred_check_branch
      %112 = sbr.rel (0) target = $region69
    $region68: #{tpu_custom_call.1} parent=1 // pred_region
      %114 = dma.done [#allocation3], 128
    $region69: #{tpu_custom_call.1} parent=1 // pred_fallthru
      _
    // Predicated region
    $region70: #{tpu_custom_call.1} parent=1 // pred_check
      _
    $region71: #{tpu_custom_call.1} parent=1 // pred_check_branch
      %116 = sbr.rel (0) target = $region73
    $region72: #{tpu_custom_call.1} parent=1 // pred_region
      %118 = dma.done [#allocation5], 64
    $region73: #{tpu_custom_call.1} parent=1 // pred_fallthru
      _
    // Predicated region
    $region74: #{tpu_custom_call.1} parent=1 // pred_check
      _
    $region75: #{tpu_custom_call.1} parent=1 // pred_check_branch
      %120 = sbr.rel (0) target = $region77
    $region76: #{tpu_custom_call.1} parent=1 // pred_region
      %122 = dma.done [#allocation5], 256
    $region77: #{tpu_custom_call.1} parent=1 // pred_fallthru
      _
    // Predicated region
    $region78: #{tpu_custom_call.1} parent=1 // pred_check
      _
    $region79: #{tpu_custom_call.1} parent=1 // pred_check_branch
      %124 = sbr.rel (0) target = $region81
    $region80: #{tpu_custom_call.1} parent=1 // pred_region
      %126 = dma.done [#allocation8], 256
    $region81: #{tpu_custom_call.1} parent=1 // pred_fallthru
      _
    // Predicated region
    $region82: #{tpu_custom_call.1} parent=1 // pred_check
      _
    $region83: #{tpu_custom_call.1} parent=1 // pred_check_branch
      %128 = sbr.rel (0) target = $region85
    $region84: #{tpu_custom_call.1} parent=1 // pred_region
      %130 = dma.done [#allocation8], 256
    $region85: #{tpu_custom_call.1} parent=1 // pred_fallthru
      _
    %v132 = vld [vmem:[#allocation2] sm:$0xf]
    %v133 = vld [vmem:[#allocation2 + $0x4] sm:$0xf]
    %v134 = vld [vmem:[#allocation4] sm:$0x3]
    %v135 = vld [vmem:[#allocation4 + $0x2] sm:$0x3]
    %v136 = vld [vmem:[%s2] sm:$0xf]
    %v137 = vld [vmem:[%s2 + $0x4] sm:$0xf]
    %v138 = vld [vmem:[%s2 + $0x8] sm:$0xf]
    %v139 = vld [vmem:[%s2 + $0xc] sm:$0xf]
    %v140 = vld [vmem:[%s4] sm:$0x1]
    %v142 = vperm.slane %v140, 0
    %v146 = vunpack.c.l.b16 %v132
    %v147 = vunpack.c.l.b16 %v133
    %v148 = vpack.c.b16 %v147, %v146
    %v153 = vunpack.c.l.b16 %v136
    %v154 = vunpack.c.l.b16 %v137
    %v155 = vunpack.c.l.b16 %v138
    %v156 = vunpack.c.l.b16 %v139
    %v157 = vpack.c.b16 %v154, %v153
    %v158 = vpack.c.b16 %v156, %v155
    %vm161 = vcmask 261120
    %v163 = vsel %vm161, %v148, 0
    %165 = vmatpush.bf16.msra.mxu0 0
    %166 = vmatpush.bf16.msra.mxu0 0
    %167 = vmatpush.bf16.msra.mxu0 0
    %168 = vmatpush.bf16.msra.mxu0 0
    %169 = vmatpush.bf16.msra.mxu0 0
    %170 = vmatpush.bf16.msra.mxu0 0
    %171 = vmatpush.bf16.msra.mxu0 %v158
    %172 = vmatpush.bf16.msra.mxu0 %v157
    %173 = vmatmul.bf16.gmra.mxu0 %v163
    %v174 = vpop.f32.mrf.mxu0
    %v175 = vadd.f32 %v142, %v174
    %v176 = vpop.f32.mrf.mxu0
    %v177 = vadd.f32 %v142, %v176
    %178 = vdwg.mxu0
    %v179 = vld [vmem:[%s3] sm:$0xf]
    %v180 = vld [vmem:[%s3 + $0x4] sm:$0xf]
    %v181 = vld [vmem:[%s3 + $0x8] sm:$0xf]
    %v182 = vld [vmem:[%s3 + $0xc] sm:$0xf]
    %v183 = vld [vmem:[%s5] sm:$0x1]
    %v185 = vperm.slane %v183, 0
    %v191 = vunpack.c.l.b16 %v179
    %v192 = vunpack.c.l.b16 %v180
    %v193 = vunpack.c.l.b16 %v181
    %v194 = vunpack.c.l.b16 %v182
    %v195 = vpack.c.b16 %v192, %v191
    %v196 = vpack.c.b16 %v194, %v193
    %199 = vmatpush.bf16.msra.mxu0 0
    %200 = vmatpush.bf16.msra.mxu0 0
    %201 = vmatpush.bf16.msra.mxu0 0
    %202 = vmatpush.bf16.msra.mxu0 0
    %203 = vmatpush.bf16.msra.mxu0 0
    %204 = vmatpush.bf16.msra.mxu0 0
    %205 = vmatpush.bf16.msra.mxu0 %v196
    %206 = vmatpush.bf16.msra.mxu0 %v195
    %207 = vmatmul.bf16.gmra.mxu0 %v163
    %v208 = vpop.f32.mrf.mxu0
    %v209 = vadd.f32 %v185, %v208
    %v210 = vpop.f32.mrf.mxu0
    %v211 = vadd.f32 %v185, %v210
    %212 = vdwg.mxu0
    %v213 = vld [vmem:[%s6] sm:$0xf]
    %v214 = vld [vmem:[%s6 + $0x4] sm:$0xf]
    %v215 = vld [vmem:[%s6 + $0x8] sm:$0xf]
    %v216 = vld [vmem:[%s6 + $0xc] sm:$0xf]
    %v217 = vld [vmem:[%s8] sm:$0x1]
    %v219 = vperm.slane %v217, 0
    %222 = vst [vmem:[#allocation1] ss:$4 sm:$0xff] %v134
    %s224 = scalar_lea.vmem [#allocation1], 1
    %225 = vst [vmem:[%s224] ss:$4 sm:$0xff] %v135
    %v226 = vld.sshfl [vmem:[#allocation1] sm:$0xff pattern:$0x73625140]
    %v231 = vunpack.c.l.b16 %v213
    %v232 = vunpack.c.l.b16 %v214
    %v233 = vunpack.c.l.b16 %v215
    %v234 = vunpack.c.l.b16 %v216
    %v235 = vpack.c.b16 %v232, %v231
    %v236 = vpack.c.b16 %v234, %v233
    %v239 = vsel %vm161, %v226, 0
    %241 = vmatpush.bf16.msra.mxu0 0
    %242 = vmatpush.bf16.msra.mxu0 0
    %243 = vmatpush.bf16.msra.mxu0 0
    %244 = vmatpush.bf16.msra.mxu0 0
    %245 = vmatpush.bf16.msra.mxu0 0
    %246 = vmatpush.bf16.msra.mxu0 0
    %247 = vmatpush.bf16.msra.mxu0 %v236
    %248 = vmatpush.bf16.msra.mxu0 %v235
    %249 = vmatmul.bf16.gmra.mxu0 %v239
    %v250 = vpop.f32.mrf.mxu0
    %v251 = vadd.f32 %v219, %v250
    %v252 = vpop.f32.mrf.mxu0
    %253 = vdwg.mxu0
    %v254 = vld [vmem:[%s7] sm:$0xf]
    %v255 = vld [vmem:[%s7 + $0x4] sm:$0xf]
    %v256 = vld [vmem:[%s7 + $0x8] sm:$0xf]
    %v257 = vld [vmem:[%s7 + $0xc] sm:$0xf]
    %v258 = vld [vmem:[%s9] sm:$0x1]
    %v260 = vperm.slane %v258, 0
    %262 = vst [vmem:[#allocation1] ss:$4 sm:$0xff] %v134
    %s263 = scalar_lea.vmem [#allocation1], 1
    %264 = vst [vmem:[%s263] ss:$4 sm:$0xff] %v135
    %v265 = vld.sshfl [vmem:[#allocation1] sm:$0xff pattern:$0x73625140]
    %v270 = vunpack.c.l.b16 %v254
    %v271 = vunpack.c.l.b16 %v255
    %v272 = vunpack.c.l.b16 %v256
    %v273 = vunpack.c.l.b16 %v257
    %v274 = vpack.c.b16 %v271, %v270
    %v275 = vpack.c.b16 %v273, %v272
    %v278 = vsel %vm161, %v265, 0
    %280 = vmatpush.bf16.msra.mxu0 0
    %281 = vmatpush.bf16.msra.mxu0 0
    %282 = vmatpush.bf16.msra.mxu0 0
    %283 = vmatpush.bf16.msra.mxu0 0
    %284 = vmatpush.bf16.msra.mxu0 0
    %285 = vmatpush.bf16.msra.mxu0 0
    %286 = vmatpush.bf16.msra.mxu0 %v275
    %287 = vmatpush.bf16.msra.mxu0 %v274
    %288 = vmatmul.bf16.gmra.mxu0 %v278
    %v289 = vpop.f32.mrf.mxu0
    %v290 = vadd.f32 %v260, %v289
    %v291 = vpop.f32.mrf.mxu0
    %292 = vdwg.mxu0
    %v293 = vpack.c.bf16 %v177, %v175
    %v294 = vld [vmem:[#allocation6] sm:$0xf]
    %v295 = vld [vmem:[#allocation6 + $0x4] sm:$0xf]
    %v296 = vld [vmem:[#allocation6 + $0x8] sm:$0xf]
    %v297 = vld [vmem:[#allocation6 + $0xc] sm:$0xf]
    %v298 = vld [vmem:[%s13] sm:$0x1]
    %v300 = vperm.slane %v298, 0
    %v306 = vunpack.c.l.b16 %v294
    %v307 = vunpack.c.l.b16 %v295
    %v308 = vunpack.c.l.b16 %v296
    %v309 = vunpack.c.l.b16 %v297
    %v310 = vpack.c.b16 %v307, %v306
    %v311 = vpack.c.b16 %v309, %v308
    %v315 = vsel %vm161, %v293, 0
    %317 = vmatpush.bf16.msra.mxu0 0
    %318 = vmatpush.bf16.msra.mxu0 0
    %319 = vmatpush.bf16.msra.mxu0 0
    %320 = vmatpush.bf16.msra.mxu0 0
    %321 = vmatpush.bf16.msra.mxu0 0
    %322 = vmatpush.bf16.msra.mxu0 0
    %323 = vmatpush.bf16.msra.mxu0 %v311
    %324 = vmatpush.bf16.msra.mxu0 %v310
    %325 = vmatmul.bf16.gmra.mxu0 %v315
    %v326 = vpop.f32.mrf.mxu0
    %v327 = vadd.f32 %v300, %v326
    %v328 = vpop.f32.mrf.mxu0
    %v329 = vadd.f32 %v300, %v328
    %330 = vdwg.mxu0
    %v331 = vpack.c.bf16 %v251, %v251
    %v332 = vld [vmem:[#allocation7] sm:$0xf]
    %v333 = vld [vmem:[#allocation7 + $0x4] sm:$0xf]
    %v334 = vld [vmem:[#allocation7 + $0x8] sm:$0xf]
    %v335 = vld [vmem:[#allocation7 + $0xc] sm:$0xf]
    %v340 = vunpack.c.l.b16 %v332
    %v341 = vunpack.c.l.b16 %v333
    %v342 = vunpack.c.l.b16 %v334
    %v343 = vunpack.c.l.b16 %v335
    %v344 = vpack.c.b16 %v341, %v340
    %v345 = vpack.c.b16 %v343, %v342
    %v349 = vsel %vm161, %v331, 0
    %351 = vmatpush.bf16.msra.mxu0 0
    %352 = vmatpush.bf16.msra.mxu0 0
    %353 = vmatpush.bf16.msra.mxu0 0
    %354 = vmatpush.bf16.msra.mxu0 0
    %355 = vmatpush.bf16.msra.mxu0 0
    %356 = vmatpush.bf16.msra.mxu0 0
    %357 = vmatpush.bf16.msra.mxu0 %v345
    %358 = vmatpush.bf16.msra.mxu0 %v344
    %359 = vmatmul.bf16.gmra.mxu0 %v349
    %v360 = vpop.f32.mrf.mxu0
    %v361 = vadd.f32 0.0, %v360
    %v362 = vpop.f32.mrf.mxu0
    %363 = vdwg.mxu0
    %v366 = vrot.slane %v209, 1
    %v367 = vrot.slane %v209, 2
    %v368 = vrot.slane %v209, 3
    %v369 = vrot.slane %v209, 4
    %v370 = vrot.slane %v209, 5
    %v371 = vrot.slane %v209, 6
    %v372 = vrot.slane %v209, 7
    %v373 = vrot.slane %v211, 1
    %v374 = vrot.slane %v211, 2
    %v375 = vrot.slane %v211, 3
    %v376 = vrot.slane %v211, 4
    %v377 = vrot.slane %v211, 5
    %v378 = vrot.slane %v211, 6
    %v379 = vrot.slane %v211, 7
    %v381 = vrot.slane %v290, 4
    %v383 = vperm.slane %v209, 0
    %v384 = vperm.slane %v366, 0
    %v385 = vperm.slane %v367, 0
    %v386 = vperm.slane %v368, 0
    %v387 = vperm.slane %v369, 0
    %v388 = vperm.slane %v370, 0
    %v389 = vperm.slane %v371, 0
    %v390 = vperm.slane %v372, 0
    %v391 = vperm.slane %v211, 0
    %v392 = vperm.slane %v373, 0
    %v393 = vperm.slane %v374, 0
    %v394 = vperm.slane %v375, 0
    %v395 = vperm.slane %v376, 0
    %v396 = vperm.slane %v377, 0
    %v397 = vperm.slane %v378, 0
    %v398 = vperm.slane %v379, 0
    %v415 = vmul.f32 %v383, %v290
    %v416 = vmul.f32 %v384, %v290
    %v417 = vmul.f32 %v385, %v290
    %v418 = vmul.f32 %v386, %v290
    %v419 = vmul.f32 %v387, %v290
    %v420 = vmul.f32 %v388, %v290
    %v421 = vmul.f32 %v389, %v290
    %v422 = vmul.f32 %v390, %v290
    %v423 = vmul.f32 %v391, %v381
    %v424 = vmul.f32 %v392, %v381
    %v425 = vmul.f32 %v393, %v381
    %v426 = vmul.f32 %v394, %v381
    %v427 = vmul.f32 %v395, %v381
    %v428 = vmul.f32 %v396, %v381
    %v429 = vmul.f32 %v397, %v381
    %v430 = vmul.f32 %v398, %v381
    %447 = vst [vmem:[#allocation1] ss:$2 sm:$0xff] %v415
    %s448 = scalar_lea.vmem [#allocation1], 1
    %449 = vst [vmem:[%s448] ss:$2 sm:$0xff] %v416
    %s450 = scalar_lea.vmem [#allocation1], 16
    %451 = vst [vmem:[%s450] ss:$2 sm:$0xff] %v417
    %s452 = scalar_lea.vmem [#allocation1], 17
    %453 = vst [vmem:[%s452] ss:$2 sm:$0xff] %v418
    %s454 = scalar_lea.vmem [#allocation1], 32
    %455 = vst [vmem:[%s454] ss:$2 sm:$0xff] %v419
    %s456 = scalar_lea.vmem [#allocation1], 33
    %457 = vst [vmem:[%s456] ss:$2 sm:$0xff] %v420
    %s458 = scalar_lea.vmem [#allocation1], 48
    %459 = vst [vmem:[%s458] ss:$2 sm:$0xff] %v421
    %s460 = scalar_lea.vmem [#allocation1], 49
    %461 = vst [vmem:[%s460] ss:$2 sm:$0xff] %v422
    %v462 = vld.sshfl [vmem:[#allocation1] sm:$0xff pattern:$0x75316420]
    %v463 = vld.sshfl [vmem:[#allocation1 + $0x10] sm:$0xff pattern:$0x75316420]
    %v464 = vld.sshfl [vmem:[#allocation1 + $0x20] sm:$0xff pattern:$0x75316420]
    %v465 = vld.sshfl [vmem:[#allocation1 + $0x30] sm:$0xff pattern:$0x75316420]
    %466 = vst [vmem:[#allocation1] ss:$2 sm:$0xff] %v423
    %467 = vst [vmem:[%s448] ss:$2 sm:$0xff] %v424
    %468 = vst [vmem:[%s450] ss:$2 sm:$0xff] %v425
    %469 = vst [vmem:[%s452] ss:$2 sm:$0xff] %v426
    %470 = vst [vmem:[%s454] ss:$2 sm:$0xff] %v427
    %471 = vst [vmem:[%s456] ss:$2 sm:$0xff] %v428
    %472 = vst [vmem:[%s458] ss:$2 sm:$0xff] %v429
    %473 = vst [vmem:[%s460] ss:$2 sm:$0xff] %v430
    %v474 = vld.sshfl [vmem:[#allocation1] sm:$0xff pattern:$0x75316420]
    %v475 = vld.sshfl [vmem:[#allocation1 + $0x10] sm:$0xff pattern:$0x75316420]
    %v476 = vld.sshfl [vmem:[#allocation1 + $0x20] sm:$0xff pattern:$0x75316420]
    %v477 = vld.sshfl [vmem:[#allocation1 + $0x30] sm:$0xff pattern:$0x75316420]
    %v486 = vpack.c.bf16 %v463, %v462
    %v487 = vpack.c.bf16 %v465, %v464
    %v488 = vpack.c.bf16 %v475, %v474
    %v489 = vpack.c.bf16 %v477, %v476
    %v490 = vld [vmem:[#allocation9] sm:$0xf]
    %v491 = vld [vmem:[#allocation9 + $0x4] sm:$0xf]
    %v492 = vld [vmem:[#allocation9 + $0x8] sm:$0xf]
    %v493 = vld [vmem:[#allocation9 + $0xc] sm:$0xf]
    %v498 = vunpack.c.l.b16 %v490
    %v499 = vunpack.c.l.b16 %v491
    %v500 = vunpack.c.l.b16 %v492
    %v501 = vunpack.c.l.b16 %v493
    %v502 = vpack.c.b16 %v499, %v498
    %v503 = vpack.c.b16 %v501, %v500
    %v507 = vsel %vm161, %v486, 0
    %v510 = vsel %vm161, %v487, 0
    %v513 = vsel %vm161, %v488, 0
    %v516 = vsel %vm161, %v489, 0
    %518 = vmatpush.bf16.msra.mxu0 0
    %519 = vmatpush.bf16.msra.mxu0 0
    %520 = vmatpush.bf16.msra.mxu0 0
    %521 = vmatpush.bf16.msra.mxu0 0
    %522 = vmatpush.bf16.msra.mxu0 0
    %523 = vmatpush.bf16.msra.mxu0 0
    %524 = vmatpush.bf16.msra.mxu0 %v503
    %525 = vmatpush.bf16.msra.mxu0 %v502
    %526 = vmatmul.bf16.gmra.mxu0 %v507
    %v527 = vpop.f32.mrf.mxu0
    %v528 = vadd.f32 0.0, %v527
    %v529 = vpop.f32.mrf.mxu0
    %v530 = vadd.f32 0.0, %v529
    %531 = vmatmul.bf16.gmra.mxu0 %v510
    %v532 = vpop.f32.mrf.mxu0
    %v533 = vadd.f32 0.0, %v532
    %v534 = vpop.f32.mrf.mxu0
    %v535 = vadd.f32 0.0, %v534
    %536 = vmatmul.bf16.gmra.mxu0 %v513
    %v537 = vpop.f32.mrf.mxu0
    %v538 = vadd.f32 0.0, %v537
    %v539 = vpop.f32.mrf.mxu0
    %v540 = vadd.f32 0.0, %v539
    %541 = vmatmul.bf16.gmra.mxu0 %v516
    %v542 = vpop.f32.mrf.mxu0
    %v543 = vadd.f32 0.0, %v542
    %v544 = vpop.f32.mrf.mxu0
    %v545 = vadd.f32 0.0, %v544
    %546 = vdwg.mxu0
    %v555 = vrot.slane %v528, 4
    %v556 = vrot.slane %v530, 4
    %v557 = vrot.slane %v533, 4
    %v558 = vrot.slane %v535, 4
    %v559 = vrot.slane %v538, 4
    %v560 = vrot.slane %v540, 4
    %v561 = vrot.slane %v543, 4
    %v562 = vrot.slane %v545, 4
    %v573 = vrot.slane %v327, 1
    %v574 = vrot.slane %v327, 2
    %v575 = vrot.slane %v327, 3
    %v576 = vrot.slane %v327, 4
    %v577 = vrot.slane %v327, 5
    %v578 = vrot.slane %v327, 6
    %v579 = vrot.slane %v327, 7
    %v580 = vrot.slane %v329, 1
    %v581 = vrot.slane %v329, 2
    %v582 = vrot.slane %v329, 3
    %v583 = vrot.slane %v329, 4
    %v584 = vrot.slane %v329, 5
    %v585 = vrot.slane %v329, 6
    %v586 = vrot.slane %v329, 7
    %v587 = vperm.slane %v327, 0
    %v588 = vperm.slane %v573, 0
    %v589 = vperm.slane %v574, 0
    %v590 = vperm.slane %v575, 0
    %v591 = vperm.slane %v576, 0
    %v592 = vperm.slane %v577, 0
    %v593 = vperm.slane %v578, 0
    %v594 = vperm.slane %v579, 0
    %v595 = vperm.slane %v329, 0
    %v596 = vperm.slane %v580, 0
    %v597 = vperm.slane %v581, 0
    %v598 = vperm.slane %v582, 0
    %v599 = vperm.slane %v583, 0
    %v600 = vperm.slane %v584, 0
    %v601 = vperm.slane %v585, 0
    %v602 = vperm.slane %v586, 0
    %v619 = vadd.f32 %v528, %v587
    %v620 = vadd.f32 %v555, %v588
    %v621 = vadd.f32 %v530, %v589
    %v622 = vadd.f32 %v556, %v590
    %v623 = vadd.f32 %v533, %v591
    %v624 = vadd.f32 %v557, %v592
    %v625 = vadd.f32 %v535, %v593
    %v626 = vadd.f32 %v558, %v594
    %v627 = vadd.f32 %v538, %v595
    %v628 = vadd.f32 %v559, %v596
    %v629 = vadd.f32 %v540, %v597
    %v630 = vadd.f32 %v560, %v598
    %v631 = vadd.f32 %v543, %v599
    %v632 = vadd.f32 %v561, %v600
    %v633 = vadd.f32 %v545, %v601
    %v634 = vadd.f32 %v562, %v602
    %v636 = vrot.slane %v361, 4
    %v638 = vadd.f32 %v619, %v361
    %v639 = vadd.f32 %v620, %v361
    %v640 = vadd.f32 %v621, %v361
    %v641 = vadd.f32 %v622, %v361
    %v642 = vadd.f32 %v623, %v361
    %v643 = vadd.f32 %v624, %v361
    %v644 = vadd.f32 %v625, %v361
    %v645 = vadd.f32 %v626, %v361
    %v646 = vadd.f32 %v627, %v636
    %v647 = vadd.f32 %v628, %v636
    %v648 = vadd.f32 %v629, %v636
    %v649 = vadd.f32 %v630, %v636
    %v650 = vadd.f32 %v631, %v636
    %v651 = vadd.f32 %v632, %v636
    %v652 = vadd.f32 %v633, %v636
    %v653 = vadd.f32 %v634, %v636
    %v654 = vmax.f32 %v638, 0.0
    %v655 = vmax.f32 %v639, 0.0
    %v656 = vmax.f32 %v640, 0.0
    %v657 = vmax.f32 %v641, 0.0
    %v658 = vmax.f32 %v642, 0.0
    %v659 = vmax.f32 %v643, 0.0
    %v660 = vmax.f32 %v644, 0.0
    %v661 = vmax.f32 %v645, 0.0
    %v662 = vmax.f32 %v646, 0.0
    %v663 = vmax.f32 %v647, 0.0
    %v664 = vmax.f32 %v648, 0.0
    %v665 = vmax.f32 %v649, 0.0
    %v666 = vmax.f32 %v650, 0.0
    %v667 = vmax.f32 %v651, 0.0
    %v668 = vmax.f32 %v652, 0.0
    %v669 = vmax.f32 %v653, 0.0
    %686 = vst [vmem:[#allocation1] ss:$2 sm:$0xff] %v654
    %s687 = scalar_lea.vmem [#allocation1], 1
    %688 = vst [vmem:[%s687] ss:$2 sm:$0xff] %v655
    %s689 = scalar_lea.vmem [#allocation1], 16
    %690 = vst [vmem:[%s689] ss:$2 sm:$0xff] %v656
    %s691 = scalar_lea.vmem [#allocation1], 17
    %692 = vst [vmem:[%s691] ss:$2 sm:$0xff] %v657
    %s693 = scalar_lea.vmem [#allocation1], 32
    %694 = vst [vmem:[%s693] ss:$2 sm:$0xff] %v658
    %s695 = scalar_lea.vmem [#allocation1], 33
    %696 = vst [vmem:[%s695] ss:$2 sm:$0xff] %v659
    %s697 = scalar_lea.vmem [#allocation1], 48
    %698 = vst [vmem:[%s697] ss:$2 sm:$0xff] %v660
    %s699 = scalar_lea.vmem [#allocation1], 49
    %700 = vst [vmem:[%s699] ss:$2 sm:$0xff] %v661
    %v701 = vld.sshfl [vmem:[#allocation1] sm:$0xff pattern:$0x75316420]
    %v702 = vld.sshfl [vmem:[#allocation1 + $0x10] sm:$0xff pattern:$0x75316420]
    %v703 = vld.sshfl [vmem:[#allocation1 + $0x20] sm:$0xff pattern:$0x75316420]
    %v704 = vld.sshfl [vmem:[#allocation1 + $0x30] sm:$0xff pattern:$0x75316420]
    %705 = vst [vmem:[#allocation1] ss:$2 sm:$0xff] %v662
    %706 = vst [vmem:[%s687] ss:$2 sm:$0xff] %v663
    %707 = vst [vmem:[%s689] ss:$2 sm:$0xff] %v664
    %708 = vst [vmem:[%s691] ss:$2 sm:$0xff] %v665
    %709 = vst [vmem:[%s693] ss:$2 sm:$0xff] %v666
    %710 = vst [vmem:[%s695] ss:$2 sm:$0xff] %v667
    %711 = vst [vmem:[%s697] ss:$2 sm:$0xff] %v668
    %712 = vst [vmem:[%s699] ss:$2 sm:$0xff] %v669
    %v713 = vld.sshfl [vmem:[#allocation1] sm:$0xff pattern:$0x75316420]
    %v714 = vld.sshfl [vmem:[#allocation1 + $0x10] sm:$0xff pattern:$0x75316420]
    %v715 = vld.sshfl [vmem:[#allocation1 + $0x20] sm:$0xff pattern:$0x75316420]
    %v716 = vld.sshfl [vmem:[#allocation1 + $0x30] sm:$0xff pattern:$0x75316420]
    %v725 = vpack.c.bf16 %v702, %v701
    %v726 = vpack.c.bf16 %v704, %v703
    %v727 = vpack.c.bf16 %v714, %v713
    %v728 = vpack.c.bf16 %v716, %v715
    %v729 = vld [vmem:[%s14] sm:$0xf]
    %v730 = vld [vmem:[%s14 + $0x4] sm:$0xf]
    %v731 = vld [vmem:[%s14 + $0x8] sm:$0xf]
    %v732 = vld [vmem:[%s14 + $0xc] sm:$0xf]
    %v733 = vld [vmem:[%s14 + $0x10] sm:$0xf]
    %v734 = vld [vmem:[%s14 + $0x14] sm:$0xf]
    %v735 = vld [vmem:[%s14 + $0x18] sm:$0xf]
    %v736 = vld [vmem:[%s14 + $0x1c] sm:$0xf]
    %v737 = vld [vmem:[%s14 + $0x20] sm:$0xf]
    %v738 = vld [vmem:[%s14 + $0x24] sm:$0xf]
    %v739 = vld [vmem:[%s14 + $0x28] sm:$0xf]
    %v740 = vld [vmem:[%s14 + $0x2c] sm:$0xf]
    %v741 = vld [vmem:[%s14 + $0x30] sm:$0xf]
    %v742 = vld [vmem:[%s14 + $0x34] sm:$0xf]
    %v743 = vld [vmem:[%s14 + $0x38] sm:$0xf]
    %v744 = vld [vmem:[%s14 + $0x3c] sm:$0xf]
    %v745 = vld [vmem:[%s15] sm:$0x1]
    %v747 = vperm.slane %v745, 0
    %v765 = vunpack.c.l.b16 %v729
    %v766 = vunpack.c.l.b16 %v730
    %v767 = vunpack.c.l.b16 %v731
    %v768 = vunpack.c.l.b16 %v732
    %v769 = vunpack.c.l.b16 %v733
    %v770 = vunpack.c.l.b16 %v734
    %v771 = vunpack.c.l.b16 %v735
    %v772 = vunpack.c.l.b16 %v736
    %v773 = vunpack.c.l.b16 %v737
    %v774 = vunpack.c.l.b16 %v738
    %v775 = vunpack.c.l.b16 %v739
    %v776 = vunpack.c.l.b16 %v740
    %v777 = vunpack.c.l.b16 %v741
    %v778 = vunpack.c.l.b16 %v742
    %v779 = vunpack.c.l.b16 %v743
    %v780 = vunpack.c.l.b16 %v744
    %v781 = vpack.c.b16 %v766, %v765
    %v782 = vpack.c.b16 %v768, %v767
    %v783 = vpack.c.b16 %v770, %v769
    %v784 = vpack.c.b16 %v772, %v771
    %v785 = vpack.c.b16 %v774, %v773
    %v786 = vpack.c.b16 %v776, %v775
    %v787 = vpack.c.b16 %v778, %v777
    %v788 = vpack.c.b16 %v780, %v779
    %797 = vmatpush.bf16.msra.mxu0 %v788
    %798 = vmatpush.bf16.msra.mxu0 %v787
    %799 = vmatpush.bf16.msra.mxu0 %v786
    %800 = vmatpush.bf16.msra.mxu0 %v785
    %801 = vmatpush.bf16.msra.mxu0 %v784
    %802 = vmatpush.bf16.msra.mxu0 %v783
    %803 = vmatpush.bf16.msra.mxu0 %v782
    %804 = vmatpush.bf16.msra.mxu0 %v781
    %805 = vmatmul.bf16.gmra.mxu0 %v725
    %v806 = vpop.f32.mrf.mxu0
    %v807 = vadd.f32 %v747, %v806
    %v808 = vpop.f32.mrf.mxu0
    %v809 = vadd.f32 %v747, %v808
    %810 = vmatmul.bf16.gmra.mxu0 %v726
    %v811 = vpop.f32.mrf.mxu0
    %v812 = vadd.f32 %v747, %v811
    %v813 = vpop.f32.mrf.mxu0
    %v814 = vadd.f32 %v747, %v813
    %815 = vmatmul.bf16.gmra.mxu0 %v727
    %v816 = vpop.f32.mrf.mxu0
    %v817 = vadd.f32 %v747, %v816
    %v818 = vpop.f32.mrf.mxu0
    %v819 = vadd.f32 %v747, %v818
    %820 = vmatmul.bf16.gmra.mxu0 %v728
    %v821 = vpop.f32.mrf.mxu0
    %v822 = vadd.f32 %v747, %v821
    %v823 = vpop.f32.mrf.mxu0
    %v824 = vadd.f32 %v747, %v823
    %825 = vdwg.mxu0
    %v834 = vrot.slane %v807, 4
    %v835 = vrot.slane %v809, 4
    %v836 = vrot.slane %v812, 4
    %v837 = vrot.slane %v814, 4
    %v838 = vrot.slane %v817, 4
    %v839 = vrot.slane %v819, 4
    %v840 = vrot.slane %v822, 4
    %v841 = vrot.slane %v824, 4
    %vm850 = vcmask 19456
    %851 = vst.msk [vmem:[%s16] sm:$0xf] %vm850, %v807
    %852 = vst.msk [vmem:[%s16 + $0x4] sm:$0xf] %vm850, %v834
    %853 = vst.msk [vmem:[%s16 + $0x8] sm:$0xf] %vm850, %v809
    %854 = vst.msk [vmem:[%s16 + $0xc] sm:$0xf] %vm850, %v835
    %855 = vst.msk [vmem:[%s16 + $0x10] sm:$0xf] %vm850, %v812
    %856 = vst.msk [vmem:[%s16 + $0x14] sm:$0xf] %vm850, %v836
    %857 = vst.msk [vmem:[%s16 + $0x18] sm:$0xf] %vm850, %v814
    %858 = vst.msk [vmem:[%s16 + $0x1c] sm:$0xf] %vm850, %v837
    %859 = vst.msk [vmem:[%s16 + $0x20] sm:$0xf] %vm850, %v817
    %860 = vst.msk [vmem:[%s16 + $0x24] sm:$0xf] %vm850, %v838
    %861 = vst.msk [vmem:[%s16 + $0x28] sm:$0xf] %vm850, %v819
    %862 = vst.msk [vmem:[%s16 + $0x2c] sm:$0xf] %vm850, %v839
    %863 = vst.msk [vmem:[%s16 + $0x30] sm:$0xf] %vm850, %v822
    %864 = vst.msk [vmem:[%s16 + $0x34] sm:$0xf] %vm850, %v840
    %865 = vst.msk [vmem:[%s16 + $0x38] sm:$0xf] %vm850, %v824
    %866 = vst.msk [vmem:[%s16 + $0x3c] sm:$0xf] %vm850, %v841
    // Predicated region
    $region86: #{tpu_custom_call.1} parent=1 // pred_check
      _
    $region87: #{tpu_custom_call.1} parent=1 // pred_check_branch
      %868 = sbr.rel (0) target = $region89
    $region88: #{tpu_custom_call.1} parent=1 // pred_region
      _
    $region89: #{tpu_custom_call.1} parent=1 // pred_fallthru
      _
    // Predicated region
    $region90: #{tpu_custom_call.1} parent=1 // pred_check
      _
    $region91: #{tpu_custom_call.1} parent=1 // pred_check_branch
      %870 = sbr.rel (0) target = $region93
    $region92: #{tpu_custom_call.1} parent=1 // pred_region
      _
    $region93: #{tpu_custom_call.1} parent=1 // pred_fallthru
      _
    %871 = vsyncpa [#allocation3], 1
    %872 = vsyncpa [#allocation5], 1
    %873 = vsyncpa [#allocation8], 1

// kernel: tpu_custom_call.1
$region0: #{tpu_custom_call.1}
  #allocation0 [shape = 'u32[]', space=smem, size = 0x4, offset = 0x4, fixed_abs, tag = 'smem constant byte address 0x4 - core index']
  #allocation1 [shape = 'u32[72,128]{1,0:T(1,128)}', space=vmem, size = 0x9000, scoped, tag = 'internal scratch']
  %s0 = inlined_call_operand.hbm [shape: bf16[2,8,32], index: 0, kind: input, shape index: {}]
  %s1 = inlined_call_operand.hbm [shape: bf16[2,4,32], index: 1, kind: input, shape index: {}]
  %s2 = inlined_call_operand.vmem [shape: bf16[32,32], index: 2, kind: input, shape index: {}]
  %s3 = inlined_call_operand.vmem [shape: bf16[32,32], index: 3, kind: input, shape index: {}]
  %s4 = inlined_call_operand.vmem [shape: f32[1,32], index: 4, kind: input, shape index: {}]
  %s5 = inlined_call_operand.vmem [shape: f32[1,32], index: 5, kind: input, shape index: {}]
  %s6 = inlined_call_operand.vmem [shape: bf16[32,32], index: 6, kind: input, shape index: {}]
  %s7 = inlined_call_operand.vmem [shape: bf16[32,32], index: 7, kind: input, shape index: {}]
  %s8 = inlined_call_operand.vmem [shape: f32[1,32], index: 8, kind: input, shape index: {}]
  %s9 = inlined_call_operand.vmem [shape: f32[1,32], index: 9, kind: input, shape index: {}]
  %s10 = inlined_call_operand.hbm [shape: bf16[32,128], index: 10, kind: input, shape index: {}]
  %s11 = inlined_call_operand.hbm [shape: bf16[32,128], index: 11, kind: input, shape index: {}]
  %s12 = inlined_call_operand.hbm [shape: bf16[32,128], index: 12, kind: input, shape index: {}]
  %s13 = inlined_call_operand.vmem [shape: f32[1,128], index: 13, kind: input, shape index: {}]
  %s14 = inlined_call_operand.vmem [shape: bf16[128,3], index: 14, kind: input, shape index: {}]
  %s15 = inlined_call_operand.vmem [shape: f32[1,3], index: 15, kind: input, shape index: {}]
  %s16 = inlined_call_operand.vmem [shape: f32[2,8,4,3], index: 16, kind: output, shape index: {}]
  %s17 = sld [smem:[#allocation0]]
  $region94: #{tpu_custom_call.1} parent=0
    _
  %s19 = ssub.s32 1, %s17
  %s20 = scalar_select 0, %s19, %s17
  $region1: #{tpu_custom_call.1} parent=0
    #allocation2 [shape = 'u8[4096]{0}', space=vmem, size = 0x1000, scoped, tag = 'input window, operand 0, single buffered']
    #allocation3 [shape = 's32[1]{0}', space=sflag, size = 0x4, scoped, tag = 'scoped memory for tpu_custom_call.1']
    #allocation4 [shape = 'u8[2048]{0}', space=vmem, size = 0x800, scoped, tag = 'input window, operand 1, single buffered']
    #allocation5 [shape = 's32[1]{0}', space=sflag, size = 0x4, scoped, tag = 'scoped memory for tpu_custom_call.1']
    #allocation6 [shape = 'u8[8192]{0}', space=vmem, size = 0x2000, scoped, tag = 'input window, operand 10, single buffered']
    #allocation7 [shape = 'u8[8192]{0}', space=vmem, size = 0x2000, scoped, tag = 'input window, operand 11, single buffered']
    #allocation8 [shape = 's32[1]{0}', space=sflag, size = 0x4, scoped, tag = 'scoped memory for tpu_custom_call.1']
    #allocation9 [shape = 'u8[8192]{0}', space=vmem, size = 0x2000, scoped, tag = 'input window, operand 12, single buffered']
    %21 = vsyncpa [#allocation3], 0
    %22 = vsyncpa [#allocation5], 0
    %23 = vsyncpa [#allocation8], 0
    // Predicated region
    $region2: #{tpu_custom_call.1} parent=1 // pred_check
      _
    $region3: #{tpu_custom_call.1} parent=1 // pred_check_branch
      %25 = sbr.rel (0) target = $region5
    $region4: #{tpu_custom_call.1} parent=1 // pred_region
      %27 = vsyncadd [#allocation3], 0
      %s28 = sshll.u32 %s0, 4
      %s29 = int_to_ptr.hbm [resolvable:$true] %s28
      %s30 = sshll.u32 [#allocation2], 4
      %s31 = int_to_ptr.vmem [resolvable:$true] %s30
      %36 = dma.hbm_to_vmem [thread:$0]  %s29, 128, %s31, [#allocation3], 64, 64, 4
    $region5: #{tpu_custom_call.1} parent=1 // pred_fallthru
      _
    // Predicated region
    $region6: #{tpu_custom_call.1} parent=1 // pred_check
      _
    $region7: #{tpu_custom_call.1} parent=1 // pred_check_branch
      %38 = sbr.rel (0) target = $region9
    $region8: #{tpu_custom_call.1} parent=1 // pred_region
      %40 = vsyncadd [#allocation5], 0
      %s41 = sshll.u32 %s1, 4
      %s42 = int_to_ptr.hbm [resolvable:$true] %s41
      %s43 = sshll.u32 [#allocation4], 4
      %s44 = int_to_ptr.vmem [resolvable:$true] %s43
      %49 = dma.hbm_to_vmem [thread:$0]  %s42, 64, %s44, [#allocation5], 32, 32, 2
    $region9: #{tpu_custom_call.1} parent=1 // pred_fallthru
      _
    // Predicated region
    $region10: #{tpu_custom_call.1} parent=1 // pred_check
      _
    $region11: #{tpu_custom_call.1} parent=1 // pred_check_branch
      %51 = sbr.rel (0) target = $region13
    $region12: #{tpu_custom_call.1} parent=1 // pred_region
      _
    $region13: #{tpu_custom_call.1} parent=1 // pred_fallthru
      _
    // Predicated region
    $region14: #{tpu_custom_call.1} parent=1 // pred_check
      _
    $region15: #{tpu_custom_call.1} parent=1 // pred_check_branch
      %53 = sbr.rel (0) target = $region17
    $region16: #{tpu_custom_call.1} parent=1 // pred_region
      _
    $region17: #{tpu_custom_call.1} parent=1 // pred_fallthru
      _
    // Predicated region
    $region18: #{tpu_custom_call.1} parent=1 // pred_check
      _
    $region19: #{tpu_custom_call.1} parent=1 // pred_check_branch
      %55 = sbr.rel (0) target = $region21
    $region20: #{tpu_custom_call.1} parent=1 // pred_region
      _
    $region21: #{tpu_custom_call.1} parent=1 // pred_fallthru
      _
    // Predicated region
    $region22: #{tpu_custom_call.1} parent=1 // pred_check
      _
    $region23: #{tpu_custom_call.1} parent=1 // pred_check_branch
      %57 = sbr.rel (0) target = $region25
    $region24: #{tpu_custom_call.1} parent=1 // pred_region
      _
    $region25: #{tpu_custom_call.1} parent=1 // pred_fallthru
      _
    // Predicated region
    $region26: #{tpu_custom_call.1} parent=1 // pred_check
      _
    $region27: #{tpu_custom_call.1} parent=1 // pred_check_branch
      %59 = sbr.rel (0) target = $region29
    $region28: #{tpu_custom_call.1} parent=1 // pred_region
      _
    $region29: #{tpu_custom_call.1} parent=1 // pred_fallthru
      _
    // Predicated region
    $region30: #{tpu_custom_call.1} parent=1 // pred_check
      _
    $region31: #{tpu_custom_call.1} parent=1 // pred_check_branch
      %61 = sbr.rel (0) target = $region33
    $region32: #{tpu_custom_call.1} parent=1 // pred_region
      _
    $region33: #{tpu_custom_call.1} parent=1 // pred_fallthru
      _
    // Predicated region
    $region34: #{tpu_custom_call.1} parent=1 // pred_check
      _
    $region35: #{tpu_custom_call.1} parent=1 // pred_check_branch
      %63 = sbr.rel (0) target = $region37
    $region36: #{tpu_custom_call.1} parent=1 // pred_region
      _
    $region37: #{tpu_custom_call.1} parent=1 // pred_fallthru
      _
    // Predicated region
    $region38: #{tpu_custom_call.1} parent=1 // pred_check
      _
    $region39: #{tpu_custom_call.1} parent=1 // pred_check_branch
      %65 = sbr.rel (0) target = $region41
    $region40: #{tpu_custom_call.1} parent=1 // pred_region
      _
    $region41: #{tpu_custom_call.1} parent=1 // pred_fallthru
      _
    // Predicated region
    $region42: #{tpu_custom_call.1} parent=1 // pred_check
      _
    $region43: #{tpu_custom_call.1} parent=1 // pred_check_branch
      %67 = sbr.rel (0) target = $region45
    $region44: #{tpu_custom_call.1} parent=1 // pred_region
      %69 = vsyncadd [#allocation5], 0
      %s70 = sshll.u32 %s10, 4
      %s71 = int_to_ptr.hbm [resolvable:$true] %s70
      %s72 = sshll.u32 [#allocation6], 4
      %s73 = int_to_ptr.vmem [resolvable:$true] %s72
      %78 = dma.hbm_to_vmem [thread:$0]  %s71, 256, %s73, [#allocation5], 64, 64, 4
    $region45: #{tpu_custom_call.1} parent=1 // pred_fallthru
      _
    // Predicated region
    $region46: #{tpu_custom_call.1} parent=1 // pred_check
      _
    $region47: #{tpu_custom_call.1} parent=1 // pred_check_branch
      %80 = sbr.rel (0) target = $region49
    $region48: #{tpu_custom_call.1} parent=1 // pred_region
      %82 = vsyncadd [#allocation8], 0
      %s83 = sshll.u32 %s11, 4
      %s84 = int_to_ptr.hbm [resolvable:$true] %s83
      %s85 = sshll.u32 [#allocation7], 4
      %s86 = int_to_ptr.vmem [resolvable:$true] %s85
      %91 = dma.hbm_to_vmem [thread:$0]  %s84, 256, %s86, [#allocation8], 64, 64, 4
    $region49: #{tpu_custom_call.1} parent=1 // pred_fallthru
      _
    // Predicated region
    $region50: #{tpu_custom_call.1} parent=1 // pred_check
      _
    $region51: #{tpu_custom_call.1} parent=1 // pred_check_branch
      %93 = sbr.rel (0) target = $region53
    $region52: #{tpu_custom_call.1} parent=1 // pred_region
      %95 = vsyncadd [#allocation8], 0
      %s96 = sshll.u32 %s12, 4
      %s97 = int_to_ptr.hbm [resolvable:$true] %s96
      %s98 = sshll.u32 [#allocation9], 4
      %s99 = int_to_ptr.vmem [resolvable:$true] %s98
      %104 = dma.hbm_to_vmem [thread:$0]  %s97, 256, %s99, [#allocation8], 64, 64, 4
    $region53: #{tpu_custom_call.1} parent=1 // pred_fallthru
      _
    // Predicated region
    $region54: #{tpu_custom_call.1} parent=1 // pred_check
      _
    $region55: #{tpu_custom_call.1} parent=1 // pred_check_branch
      %106 = sbr.rel (0) target = $region57
    $region56: #{tpu_custom_call.1} parent=1 // pred_region
      _
    $region57: #{tpu_custom_call.1} parent=1 // pred_fallthru
      _
    // Predicated region
    $region58: #{tpu_custom_call.1} parent=1 // pred_check
      _
    $region59: #{tpu_custom_call.1} parent=1 // pred_check_branch
      %108 = sbr.rel (0) target = $region61
    $region60: #{tpu_custom_call.1} parent=1 // pred_region
      _
    $region61: #{tpu_custom_call.1} parent=1 // pred_fallthru
      _
    // Predicated region
    $region62: #{tpu_custom_call.1} parent=1 // pred_check
      _
    $region63: #{tpu_custom_call.1} parent=1 // pred_check_branch
      %110 = sbr.rel (0) target = $region65
    $region64: #{tpu_custom_call.1} parent=1 // pred_region
      _
    $region65: #{tpu_custom_call.1} parent=1 // pred_fallthru
      _
    // Predicated region
    $region66: #{tpu_custom_call.1} parent=1 // pred_check
      _
    $region67: #{tpu_custom_call.1} parent=1 // pred_check_branch
      %112 = sbr.rel (0) target = $region69
    $region68: #{tpu_custom_call.1} parent=1 // pred_region
      %114 = dma.done [#allocation3], 128
    $region69: #{tpu_custom_call.1} parent=1 // pred_fallthru
      _
    // Predicated region
    $region70: #{tpu_custom_call.1} parent=1 // pred_check
      _
    $region71: #{tpu_custom_call.1} parent=1 // pred_check_branch
      %116 = sbr.rel (0) target = $region73
    $region72: #{tpu_custom_call.1} parent=1 // pred_region
      %118 = dma.done [#allocation5], 64
    $region73: #{tpu_custom_call.1} parent=1 // pred_fallthru
      _
    // Predicated region
    $region74: #{tpu_custom_call.1} parent=1 // pred_check
      _
    $region75: #{tpu_custom_call.1} parent=1 // pred_check_branch
      %120 = sbr.rel (0) target = $region77
    $region76: #{tpu_custom_call.1} parent=1 // pred_region
      %122 = dma.done [#allocation5], 256
    $region77: #{tpu_custom_call.1} parent=1 // pred_fallthru
      _
    // Predicated region
    $region78: #{tpu_custom_call.1} parent=1 // pred_check
      _
    $region79: #{tpu_custom_call.1} parent=1 // pred_check_branch
      %124 = sbr.rel (0) target = $region81
    $region80: #{tpu_custom_call.1} parent=1 // pred_region
      %126 = dma.done [#allocation8], 256
    $region81: #{tpu_custom_call.1} parent=1 // pred_fallthru
      _
    // Predicated region
    $region82: #{tpu_custom_call.1} parent=1 // pred_check
      _
    $region83: #{tpu_custom_call.1} parent=1 // pred_check_branch
      %128 = sbr.rel (0) target = $region85
    $region84: #{tpu_custom_call.1} parent=1 // pred_region
      %130 = dma.done [#allocation8], 256
    $region85: #{tpu_custom_call.1} parent=1 // pred_fallthru
      _
    %v132 = vld [vmem:[#allocation2] sm:$0xf]
    %v133 = vld [vmem:[#allocation2 + $0x4] sm:$0xf]
    %v134 = vld [vmem:[#allocation4] sm:$0x3]
    %v135 = vld [vmem:[#allocation4 + $0x2] sm:$0x3]
    %v136 = vld [vmem:[%s2] sm:$0xf]
    %v137 = vld [vmem:[%s2 + $0x4] sm:$0xf]
    %v138 = vld [vmem:[%s2 + $0x8] sm:$0xf]
    %v139 = vld [vmem:[%s2 + $0xc] sm:$0xf]
    %v140 = vld [vmem:[%s4] sm:$0x1]
    %v142 = vperm.slane %v140, 0
    %v146 = vunpack.c.l.b16 %v132
    %v147 = vunpack.c.l.b16 %v133
    %v148 = vpack.c.b16 %v147, %v146
    %v153 = vunpack.c.l.b16 %v136
    %v154 = vunpack.c.l.b16 %v137
    %v155 = vunpack.c.l.b16 %v138
    %v156 = vunpack.c.l.b16 %v139
    %v157 = vpack.c.b16 %v154, %v153
    %v158 = vpack.c.b16 %v156, %v155
    %vm161 = vcmask 261120
    %v163 = vsel %vm161, %v148, 0
    %165 = vmatpush.bf16.msra.mxu0 0
    %166 = vmatpush.bf16.msra.mxu0 0
    %167 = vmatpush.bf16.msra.mxu0 0
    %168 = vmatpush.bf16.msra.mxu0 0
    %169 = vmatpush.bf16.msra.mxu0 0
    %170 = vmatpush.bf16.msra.mxu0 0
    %171 = vmatpush.bf16.msra.mxu0 %v158
    %172 = vmatpush.bf16.msra.mxu0 %v157
    %173 = vmatmul.bf16.gmra.mxu0 %v163
    %v174 = vpop.f32.mrf.mxu0
    %v175 = vadd.f32 %v142, %v174
    %v176 = vpop.f32.mrf.mxu0
    %v177 = vadd.f32 %v142, %v176
    %178 = vdwg.mxu0
    %v179 = vld [vmem:[%s3] sm:$0xf]
    %v180 = vld [vmem:[%s3 + $0x4] sm:$0xf]
    %v181 = vld [vmem:[%s3 + $0x8] sm:$0xf]
    %v182 = vld [vmem:[%s3 + $0xc] sm:$0xf]
    %v183 = vld [vmem:[%s5] sm:$0x1]
    %v185 = vperm.slane %v183, 0
    %v191 = vunpack.c.l.b16 %v179
    %v192 = vunpack.c.l.b16 %v180
    %v193 = vunpack.c.l.b16 %v181
    %v194 = vunpack.c.l.b16 %v182
    %v195 = vpack.c.b16 %v192, %v191
    %v196 = vpack.c.b16 %v194, %v193
    %199 = vmatpush.bf16.msra.mxu0 0
    %200 = vmatpush.bf16.msra.mxu0 0
    %201 = vmatpush.bf16.msra.mxu0 0
    %202 = vmatpush.bf16.msra.mxu0 0
    %203 = vmatpush.bf16.msra.mxu0 0
    %204 = vmatpush.bf16.msra.mxu0 0
    %205 = vmatpush.bf16.msra.mxu0 %v196
    %206 = vmatpush.bf16.msra.mxu0 %v195
    %207 = vmatmul.bf16.gmra.mxu0 %v163
    %v208 = vpop.f32.mrf.mxu0
    %v209 = vadd.f32 %v185, %v208
    %v210 = vpop.f32.mrf.mxu0
    %v211 = vadd.f32 %v185, %v210
    %212 = vdwg.mxu0
    %v213 = vld [vmem:[%s6] sm:$0xf]
    %v214 = vld [vmem:[%s6 + $0x4] sm:$0xf]
    %v215 = vld [vmem:[%s6 + $0x8] sm:$0xf]
    %v216 = vld [vmem:[%s6 + $0xc] sm:$0xf]
    %v217 = vld [vmem:[%s8] sm:$0x1]
    %v219 = vperm.slane %v217, 0
    %222 = vst [vmem:[#allocation1] ss:$4 sm:$0xff] %v134
    %s224 = scalar_lea.vmem [#allocation1], 1
    %225 = vst [vmem:[%s224] ss:$4 sm:$0xff] %v135
    %v226 = vld.sshfl [vmem:[#allocation1] sm:$0xff pattern:$0x73625140]
    %v231 = vunpack.c.l.b16 %v213
    %v232 = vunpack.c.l.b16 %v214
    %v233 = vunpack.c.l.b16 %v215
    %v234 = vunpack.c.l.b16 %v216
    %v235 = vpack.c.b16 %v232, %v231
    %v236 = vpack.c.b16 %v234, %v233
    %v239 = vsel %vm161, %v226, 0
    %241 = vmatpush.bf16.msra.mxu0 0
    %242 = vmatpush.bf16.msra.mxu0 0
    %243 = vmatpush.bf16.msra.mxu0 0
    %244 = vmatpush.bf16.msra.mxu0 0
    %245 = vmatpush.bf16.msra.mxu0 0
    %246 = vmatpush.bf16.msra.mxu0 0
    %247 = vmatpush.bf16.msra.mxu0 %v236
    %248 = vmatpush.bf16.msra.mxu0 %v235
    %249 = vmatmul.bf16.gmra.mxu0 %v239
    %v250 = vpop.f32.mrf.mxu0
    %v251 = vadd.f32 %v219, %v250
    %v252 = vpop.f32.mrf.mxu0
    %253 = vdwg.mxu0
    %v254 = vld [vmem:[%s7] sm:$0xf]
    %v255 = vld [vmem:[%s7 + $0x4] sm:$0xf]
    %v256 = vld [vmem:[%s7 + $0x8] sm:$0xf]
    %v257 = vld [vmem:[%s7 + $0xc] sm:$0xf]
    %v258 = vld [vmem:[%s9] sm:$0x1]
    %v260 = vperm.slane %v258, 0
    %262 = vst [vmem:[#allocation1] ss:$4 sm:$0xff] %v134
    %s263 = scalar_lea.vmem [#allocation1], 1
    %264 = vst [vmem:[%s263] ss:$4 sm:$0xff] %v135
    %v265 = vld.sshfl [vmem:[#allocation1] sm:$0xff pattern:$0x73625140]
    %v270 = vunpack.c.l.b16 %v254
    %v271 = vunpack.c.l.b16 %v255
    %v272 = vunpack.c.l.b16 %v256
    %v273 = vunpack.c.l.b16 %v257
    %v274 = vpack.c.b16 %v271, %v270
    %v275 = vpack.c.b16 %v273, %v272
    %v278 = vsel %vm161, %v265, 0
    %280 = vmatpush.bf16.msra.mxu0 0
    %281 = vmatpush.bf16.msra.mxu0 0
    %282 = vmatpush.bf16.msra.mxu0 0
    %283 = vmatpush.bf16.msra.mxu0 0
    %284 = vmatpush.bf16.msra.mxu0 0
    %285 = vmatpush.bf16.msra.mxu0 0
    %286 = vmatpush.bf16.msra.mxu0 %v275
    %287 = vmatpush.bf16.msra.mxu0 %v274
    %288 = vmatmul.bf16.gmra.mxu0 %v278
    %v289 = vpop.f32.mrf.mxu0
    %v290 = vadd.f32 %v260, %v289
    %v291 = vpop.f32.mrf.mxu0
    %292 = vdwg.mxu0
    %v293 = vpack.c.bf16 %v177, %v175
    %v294 = vld [vmem:[#allocation6] sm:$0xf]
    %v295 = vld [vmem:[#allocation6 + $0x4] sm:$0xf]
    %v296 = vld [vmem:[#allocation6 + $0x8] sm:$0xf]
    %v297 = vld [vmem:[#allocation6 + $0xc] sm:$0xf]
    %v298 = vld [vmem:[%s13] sm:$0x1]
    %v300 = vperm.slane %v298, 0
    %v306 = vunpack.c.l.b16 %v294
    %v307 = vunpack.c.l.b16 %v295
    %v308 = vunpack.c.l.b16 %v296
    %v309 = vunpack.c.l.b16 %v297
    %v310 = vpack.c.b16 %v307, %v306
    %v311 = vpack.c.b16 %v309, %v308
    %v315 = vsel %vm161, %v293, 0
    %317 = vmatpush.bf16.msra.mxu0 0
    %318 = vmatpush.bf16.msra.mxu0 0
    %319 = vmatpush.bf16.msra.mxu0 0
    %320 = vmatpush.bf16.msra.mxu0 0
    %321 = vmatpush.bf16.msra.mxu0 0
    %322 = vmatpush.bf16.msra.mxu0 0
    %323 = vmatpush.bf16.msra.mxu0 %v311
    %324 = vmatpush.bf16.msra.mxu0 %v310
    %325 = vmatmul.bf16.gmra.mxu0 %v315
    %v326 = vpop.f32.mrf.mxu0
    %v327 = vadd.f32 %v300, %v326
    %v328 = vpop.f32.mrf.mxu0
    %v329 = vadd.f32 %v300, %v328
    %330 = vdwg.mxu0
    %v331 = vpack.c.bf16 %v251, %v251
    %v332 = vld [vmem:[#allocation7] sm:$0xf]
    %v333 = vld [vmem:[#allocation7 + $0x4] sm:$0xf]
    %v334 = vld [vmem:[#allocation7 + $0x8] sm:$0xf]
    %v335 = vld [vmem:[#allocation7 + $0xc] sm:$0xf]
    %v340 = vunpack.c.l.b16 %v332
    %v341 = vunpack.c.l.b16 %v333
    %v342 = vunpack.c.l.b16 %v334
    %v343 = vunpack.c.l.b16 %v335
    %v344 = vpack.c.b16 %v341, %v340
    %v345 = vpack.c.b16 %v343, %v342
    %v349 = vsel %vm161, %v331, 0
    %351 = vmatpush.bf16.msra.mxu0 0
    %352 = vmatpush.bf16.msra.mxu0 0
    %353 = vmatpush.bf16.msra.mxu0 0
    %354 = vmatpush.bf16.msra.mxu0 0
    %355 = vmatpush.bf16.msra.mxu0 0
    %356 = vmatpush.bf16.msra.mxu0 0
    %357 = vmatpush.bf16.msra.mxu0 %v345
    %358 = vmatpush.bf16.msra.mxu0 %v344
    %359 = vmatmul.bf16.gmra.mxu0 %v349
    %v360 = vpop.f32.mrf.mxu0
    %v361 = vadd.f32 0.0, %v360
    %v362 = vpop.f32.mrf.mxu0
    %363 = vdwg.mxu0
    %v366 = vrot.slane %v209, 1
    %v367 = vrot.slane %v209, 2
    %v368 = vrot.slane %v209, 3
    %v369 = vrot.slane %v209, 4
    %v370 = vrot.slane %v209, 5
    %v371 = vrot.slane %v209, 6
    %v372 = vrot.slane %v209, 7
    %v373 = vrot.slane %v211, 1
    %v374 = vrot.slane %v211, 2
    %v375 = vrot.slane %v211, 3
    %v376 = vrot.slane %v211, 4
    %v377 = vrot.slane %v211, 5
    %v378 = vrot.slane %v211, 6
    %v379 = vrot.slane %v211, 7
    %v381 = vrot.slane %v290, 4
    %v383 = vperm.slane %v209, 0
    %v384 = vperm.slane %v366, 0
    %v385 = vperm.slane %v367, 0
    %v386 = vperm.slane %v368, 0
    %v387 = vperm.slane %v369, 0
    %v388 = vperm.slane %v370, 0
    %v389 = vperm.slane %v371, 0
    %v390 = vperm.slane %v372, 0
    %v391 = vperm.slane %v211, 0
    %v392 = vperm.slane %v373, 0
    %v393 = vperm.slane %v374, 0
    %v394 = vperm.slane %v375, 0
    %v395 = vperm.slane %v376, 0
    %v396 = vperm.slane %v377, 0
    %v397 = vperm.slane %v378, 0
    %v398 = vperm.slane %v379, 0
    %v415 = vmul.f32 %v383, %v290
    %v416 = vmul.f32 %v384, %v290
    %v417 = vmul.f32 %v385, %v290
    %v418 = vmul.f32 %v386, %v290
    %v419 = vmul.f32 %v387, %v290
    %v420 = vmul.f32 %v388, %v290
    %v421 = vmul.f32 %v389, %v290
    %v422 = vmul.f32 %v390, %v290
    %v423 = vmul.f32 %v391, %v381
    %v424 = vmul.f32 %v392, %v381
    %v425 = vmul.f32 %v393, %v381
    %v426 = vmul.f32 %v394, %v381
    %v427 = vmul.f32 %v395, %v381
    %v428 = vmul.f32 %v396, %v381
    %v429 = vmul.f32 %v397, %v381
    %v430 = vmul.f32 %v398, %v381
    %447 = vst [vmem:[#allocation1] ss:$2 sm:$0xff] %v415
    %s448 = scalar_lea.vmem [#allocation1], 1
    %449 = vst [vmem:[%s448] ss:$2 sm:$0xff] %v416
    %s450 = scalar_lea.vmem [#allocation1], 16
    %451 = vst [vmem:[%s450] ss:$2 sm:$0xff] %v417
    %s452 = scalar_lea.vmem [#allocation1], 17
    %453 = vst [vmem:[%s452] ss:$2 sm:$0xff] %v418
    %s454 = scalar_lea.vmem [#allocation1], 32
    %455 = vst [vmem:[%s454] ss:$2 sm:$0xff] %v419
    %s456 = scalar_lea.vmem [#allocation1], 33
    %457 = vst [vmem:[%s456] ss:$2 sm:$0xff] %v420
    %s458 = scalar_lea.vmem [#allocation1], 48
    %459 = vst [vmem:[%s458] ss:$2 sm:$0xff] %v421
    %s460 = scalar_lea.vmem [#allocation1], 49
    %461 = vst [vmem:[%s460] ss:$2 sm:$0xff] %v422
    %v462 = vld.sshfl [vmem:[#allocation1] sm:$0xff pattern:$0x75316420]
    %v463 = vld.sshfl [vmem:[#allocation1 + $0x10] sm:$0xff pattern:$0x75316420]
    %v464 = vld.sshfl [vmem:[#allocation1 + $0x20] sm:$0xff pattern:$0x75316420]
    %v465 = vld.sshfl [vmem:[#allocation1 + $0x30] sm:$0xff pattern:$0x75316420]
    %466 = vst [vmem:[#allocation1] ss:$2 sm:$0xff] %v423
    %467 = vst [vmem:[%s448] ss:$2 sm:$0xff] %v424
    %468 = vst [vmem:[%s450] ss:$2 sm:$0xff] %v425
    %469 = vst [vmem:[%s452] ss:$2 sm:$0xff] %v426
    %470 = vst [vmem:[%s454] ss:$2 sm:$0xff] %v427
    %471 = vst [vmem:[%s456] ss:$2 sm:$0xff] %v428
    %472 = vst [vmem:[%s458] ss:$2 sm:$0xff] %v429
    %473 = vst [vmem:[%s460] ss:$2 sm:$0xff] %v430
    %v474 = vld.sshfl [vmem:[#allocation1] sm:$0xff pattern:$0x75316420]
    %v475 = vld.sshfl [vmem:[#allocation1 + $0x10] sm:$0xff pattern:$0x75316420]
    %v476 = vld.sshfl [vmem:[#allocation1 + $0x20] sm:$0xff pattern:$0x75316420]
    %v477 = vld.sshfl [vmem:[#allocation1 + $0x30] sm:$0xff pattern:$0x75316420]
    %v486 = vpack.c.bf16 %v463, %v462
    %v487 = vpack.c.bf16 %v465, %v464
    %v488 = vpack.c.bf16 %v475, %v474
    %v489 = vpack.c.bf16 %v477, %v476
    %v490 = vld [vmem:[#allocation9] sm:$0xf]
    %v491 = vld [vmem:[#allocation9 + $0x4] sm:$0xf]
    %v492 = vld [vmem:[#allocation9 + $0x8] sm:$0xf]
    %v493 = vld [vmem:[#allocation9 + $0xc] sm:$0xf]
    %v498 = vunpack.c.l.b16 %v490
    %v499 = vunpack.c.l.b16 %v491
    %v500 = vunpack.c.l.b16 %v492
    %v501 = vunpack.c.l.b16 %v493
    %v502 = vpack.c.b16 %v499, %v498
    %v503 = vpack.c.b16 %v501, %v500
    %v507 = vsel %vm161, %v486, 0
    %v510 = vsel %vm161, %v487, 0
    %v513 = vsel %vm161, %v488, 0
    %v516 = vsel %vm161, %v489, 0
    %518 = vmatpush.bf16.msra.mxu0 0
    %519 = vmatpush.bf16.msra.mxu0 0
    %520 = vmatpush.bf16.msra.mxu0 0
    %521 = vmatpush.bf16.msra.mxu0 0
    %522 = vmatpush.bf16.msra.mxu0 0
    %523 = vmatpush.bf16.msra.mxu0 0
    %524 = vmatpush.bf16.msra.mxu0 %v503
    %525 = vmatpush.bf16.msra.mxu0 %v502
    %526 = vmatmul.bf16.gmra.mxu0 %v507
    %v527 = vpop.f32.mrf.mxu0
    %v528 = vadd.f32 0.0, %v527
    %v529 = vpop.f32.mrf.mxu0
    %v530 = vadd.f32 0.0, %v529
    %531 = vmatmul.bf16.gmra.mxu0 %v510
    %v532 = vpop.f32.mrf.mxu0
    %v533 = vadd.f32 0.0, %v532
    %v534 = vpop.f32.mrf.mxu0
    %v535 = vadd.f32 0.0, %v534
    %536 = vmatmul.bf16.gmra.mxu0 %v513
    %v537 = vpop.f32.mrf.mxu0
    %v538 = vadd.f32 0.0, %v537
    %v539 = vpop.f32.mrf.mxu0
    %v540 = vadd.f32 0.0, %v539
    %541 = vmatmul.bf16.gmra.mxu0 %v516
    %v542 = vpop.f32.mrf.mxu0
    %v543 = vadd.f32 0.0, %v542
    %v544 = vpop.f32.mrf.mxu0
    %v545 = vadd.f32 0.0, %v544
    %546 = vdwg.mxu0
    %v555 = vrot.slane %v528, 4
    %v556 = vrot.slane %v530, 4
    %v557 = vrot.slane %v533, 4
    %v558 = vrot.slane %v535, 4
    %v559 = vrot.slane %v538, 4
    %v560 = vrot.slane %v540, 4
    %v561 = vrot.slane %v543, 4
    %v562 = vrot.slane %v545, 4
    %v573 = vrot.slane %v327, 1
    %v574 = vrot.slane %v327, 2
    %v575 = vrot.slane %v327, 3
    %v576 = vrot.slane %v327, 4
    %v577 = vrot.slane %v327, 5
    %v578 = vrot.slane %v327, 6
    %v579 = vrot.slane %v327, 7
    %v580 = vrot.slane %v329, 1
    %v581 = vrot.slane %v329, 2
    %v582 = vrot.slane %v329, 3
    %v583 = vrot.slane %v329, 4
    %v584 = vrot.slane %v329, 5
    %v585 = vrot.slane %v329, 6
    %v586 = vrot.slane %v329, 7
    %v587 = vperm.slane %v327, 0
    %v588 = vperm.slane %v573, 0
    %v589 = vperm.slane %v574, 0
    %v590 = vperm.slane %v575, 0
    %v591 = vperm.slane %v576, 0
    %v592 = vperm.slane %v577, 0
    %v593 = vperm.slane %v578, 0
    %v594 = vperm.slane %v579, 0
    %v595 = vperm.slane %v329, 0
    %v596 = vperm.slane %v580, 0
    %v597 = vperm.slane %v581, 0
    %v598 = vperm.slane %v582, 0
    %v599 = vperm.slane %v583, 0
    %v600 = vperm.slane %v584, 0
    %v601 = vperm.slane %v585, 0
    %v602 = vperm.slane %v586, 0
    %v619 = vadd.f32 %v528, %v587
    %v620 = vadd.f32 %v555, %v588
    %v621 = vadd.f32 %v530, %v589
    %v622 = vadd.f32 %v556, %v590
    %v623 = vadd.f32 %v533, %v591
    %v624 = vadd.f32 %v557, %v592
    %v625 = vadd.f32 %v535, %v593
    %v626 = vadd.f32 %v558, %v594
    %v627 = vadd.f32 %v538, %v595
    %v628 = vadd.f32 %v559, %v596
    %v629 = vadd.f32 %v540, %v597
    %v630 = vadd.f32 %v560, %v598
    %v631 = vadd.f32 %v543, %v599
    %v632 = vadd.f32 %v561, %v600
    %v633 = vadd.f32 %v545, %v601
    %v634 = vadd.f32 %v562, %v602
    %v636 = vrot.slane %v361, 4
    %v638 = vadd.f32 %v619, %v361
    %v639 = vadd.f32 %v620, %v361
    %v640 = vadd.f32 %v621, %v361
    %v641 = vadd.f32 %v622, %v361
    %v642 = vadd.f32 %v623, %v361
    %v643 = vadd.f32 %v624, %v361
    %v644 = vadd.f32 %v625, %v361
    %v645 = vadd.f32 %v626, %v361
    %v646 = vadd.f32 %v627, %v636
    %v647 = vadd.f32 %v628, %v636
    %v648 = vadd.f32 %v629, %v636
    %v649 = vadd.f32 %v630, %v636
    %v650 = vadd.f32 %v631, %v636
    %v651 = vadd.f32 %v632, %v636
    %v652 = vadd.f32 %v633, %v636
    %v653 = vadd.f32 %v634, %v636
    %v654 = vmax.f32 %v638, 0.0
    %v655 = vmax.f32 %v639, 0.0
    %v656 = vmax.f32 %v640, 0.0
    %v657 = vmax.f32 %v641, 0.0
    %v658 = vmax.f32 %v642, 0.0
    %v659 = vmax.f32 %v643, 0.0
    %v660 = vmax.f32 %v644, 0.0
    %v661 = vmax.f32 %v645, 0.0
    %v662 = vmax.f32 %v646, 0.0
    %v663 = vmax.f32 %v647, 0.0
    %v664 = vmax.f32 %v648, 0.0
    %v665 = vmax.f32 %v649, 0.0
    %v666 = vmax.f32 %v650, 0.0
    %v667 = vmax.f32 %v651, 0.0
    %v668 = vmax.f32 %v652, 0.0
    %v669 = vmax.f32 %v653, 0.0
    %686 = vst [vmem:[#allocation1] ss:$2 sm:$0xff] %v654
    %s687 = scalar_lea.vmem [#allocation1], 1
    %688 = vst [vmem:[%s687] ss:$2 sm:$0xff] %v655
    %s689 = scalar_lea.vmem [#allocation1], 16
    %690 = vst [vmem:[%s689] ss:$2 sm:$0xff] %v656
    %s691 = scalar_lea.vmem [#allocation1], 17
    %692 = vst [vmem:[%s691] ss:$2 sm:$0xff] %v657
    %s693 = scalar_lea.vmem [#allocation1], 32
    %694 = vst [vmem:[%s693] ss:$2 sm:$0xff] %v658
    %s695 = scalar_lea.vmem [#allocation1], 33
    %696 = vst [vmem:[%s695] ss:$2 sm:$0xff] %v659
    %s697 = scalar_lea.vmem [#allocation1], 48
    %698 = vst [vmem:[%s697] ss:$2 sm:$0xff] %v660
    %s699 = scalar_lea.vmem [#allocation1], 49
    %700 = vst [vmem:[%s699] ss:$2 sm:$0xff] %v661
    %v701 = vld.sshfl [vmem:[#allocation1] sm:$0xff pattern:$0x75316420]
    %v702 = vld.sshfl [vmem:[#allocation1 + $0x10] sm:$0xff pattern:$0x75316420]
    %v703 = vld.sshfl [vmem:[#allocation1 + $0x20] sm:$0xff pattern:$0x75316420]
    %v704 = vld.sshfl [vmem:[#allocation1 + $0x30] sm:$0xff pattern:$0x75316420]
    %705 = vst [vmem:[#allocation1] ss:$2 sm:$0xff] %v662
    %706 = vst [vmem:[%s687] ss:$2 sm:$0xff] %v663
    %707 = vst [vmem:[%s689] ss:$2 sm:$0xff] %v664
    %708 = vst [vmem:[%s691] ss:$2 sm:$0xff] %v665
    %709 = vst [vmem:[%s693] ss:$2 sm:$0xff] %v666
    %710 = vst [vmem:[%s695] ss:$2 sm:$0xff] %v667
    %711 = vst [vmem:[%s697] ss:$2 sm:$0xff] %v668
    %712 = vst [vmem:[%s699] ss:$2 sm:$0xff] %v669
    %v713 = vld.sshfl [vmem:[#allocation1] sm:$0xff pattern:$0x75316420]
    %v714 = vld.sshfl [vmem:[#allocation1 + $0x10] sm:$0xff pattern:$0x75316420]
    %v715 = vld.sshfl [vmem:[#allocation1 + $0x20] sm:$0xff pattern:$0x75316420]
    %v716 = vld.sshfl [vmem:[#allocation1 + $0x30] sm:$0xff pattern:$0x75316420]
    %v725 = vpack.c.bf16 %v702, %v701
    %v726 = vpack.c.bf16 %v704, %v703
    %v727 = vpack.c.bf16 %v714, %v713
    %v728 = vpack.c.bf16 %v716, %v715
    %v729 = vld [vmem:[%s14] sm:$0xf]
    %v730 = vld [vmem:[%s14 + $0x4] sm:$0xf]
    %v731 = vld [vmem:[%s14 + $0x8] sm:$0xf]
    %v732 = vld [vmem:[%s14 + $0xc] sm:$0xf]
    %v733 = vld [vmem:[%s14 + $0x10] sm:$0xf]
    %v734 = vld [vmem:[%s14 + $0x14] sm:$0xf]
    %v735 = vld [vmem:[%s14 + $0x18] sm:$0xf]
    %v736 = vld [vmem:[%s14 + $0x1c] sm:$0xf]
    %v737 = vld [vmem:[%s14 + $0x20] sm:$0xf]
    %v738 = vld [vmem:[%s14 + $0x24] sm:$0xf]
    %v739 = vld [vmem:[%s14 + $0x28] sm:$0xf]
    %v740 = vld [vmem:[%s14 + $0x2c] sm:$0xf]
    %v741 = vld [vmem:[%s14 + $0x30] sm:$0xf]
    %v742 = vld [vmem:[%s14 + $0x34] sm:$0xf]
    %v743 = vld [vmem:[%s14 + $0x38] sm:$0xf]
    %v744 = vld [vmem:[%s14 + $0x3c] sm:$0xf]
    %v745 = vld [vmem:[%s15] sm:$0x1]
    %v747 = vperm.slane %v745, 0
    %v765 = vunpack.c.l.b16 %v729
    %v766 = vunpack.c.l.b16 %v730
    %v767 = vunpack.c.l.b16 %v731
    %v768 = vunpack.c.l.b16 %v732
    %v769 = vunpack.c.l.b16 %v733
    %v770 = vunpack.c.l.b16 %v734
    %v771 = vunpack.c.l.b16 %v735
    %v772 = vunpack.c.l.b16 %v736
    %v773 = vunpack.c.l.b16 %v737
    %v774 = vunpack.c.l.b16 %v738
    %v775 = vunpack.c.l.b16 %v739
    %v776 = vunpack.c.l.b16 %v740
    %v777 = vunpack.c.l.b16 %v741
    %v778 = vunpack.c.l.b16 %v742
    %v779 = vunpack.c.l.b16 %v743
    %v780 = vunpack.c.l.b16 %v744
    %v781 = vpack.c.b16 %v766, %v765
    %v782 = vpack.c.b16 %v768, %v767
    %v783 = vpack.c.b16 %v770, %v769
    %v784 = vpack.c.b16 %v772, %v771
    %v785 = vpack.c.b16 %v774, %v773
    %v786 = vpack.c.b16 %v776, %v775
    %v787 = vpack.c.b16 %v778, %v777
    %v788 = vpack.c.b16 %v780, %v779
    %797 = vmatpush.bf16.msra.mxu0 %v788
    %798 = vmatpush.bf16.msra.mxu0 %v787
    %799 = vmatpush.bf16.msra.mxu0 %v786
    %800 = vmatpush.bf16.msra.mxu0 %v785
    %801 = vmatpush.bf16.msra.mxu0 %v784
    %802 = vmatpush.bf16.msra.mxu0 %v783
    %803 = vmatpush.bf16.msra.mxu0 %v782
    %804 = vmatpush.bf16.msra.mxu0 %v781
    %805 = vmatmul.bf16.gmra.mxu0 %v725
    %v806 = vpop.f32.mrf.mxu0
    %v807 = vadd.f32 %v747, %v806
    %v808 = vpop.f32.mrf.mxu0
    %v809 = vadd.f32 %v747, %v808
    %810 = vmatmul.bf16.gmra.mxu0 %v726
    %v811 = vpop.f32.mrf.mxu0
    %v812 = vadd.f32 %v747, %v811
    %v813 = vpop.f32.mrf.mxu0
    %v814 = vadd.f32 %v747, %v813
    %815 = vmatmul.bf16.gmra.mxu0 %v727
    %v816 = vpop.f32.mrf.mxu0
    %v817 = vadd.f32 %v747, %v816
    %v818 = vpop.f32.mrf.mxu0
    %v819 = vadd.f32 %v747, %v818
    %820 = vmatmul.bf16.gmra.mxu0 %v728
    %v821 = vpop.f32.mrf.mxu0
    %v822 = vadd.f32 %v747, %v821
    %v823 = vpop.f32.mrf.mxu0
    %v824 = vadd.f32 %v747, %v823
    %825 = vdwg.mxu0
    %v834 = vrot.slane %v807, 4
    %v835 = vrot.slane %v809, 4
    %v836 = vrot.slane %v812, 4
    %v837 = vrot.slane %v814, 4
    %v838 = vrot.slane %v817, 4
    %v839 = vrot.slane %v819, 4
    %v840 = vrot.slane %v822, 4
    %v841 = vrot.slane %v824, 4
    %vm850 = vcmask 19456
    %851 = vst.msk [vmem:[%s16] sm:$0xf] %vm850, %v807
    %852 = vst.msk [vmem:[%s16 + $0x4] sm:$0xf] %vm850, %v834
    %853 = vst.msk [vmem:[%s16 + $0x8] sm:$0xf] %vm850, %v809
    %854 = vst.msk [vmem:[%s16 + $0xc] sm:$0xf] %vm850, %v835
    %855 = vst.msk [vmem:[%s16 + $0x10] sm:$0xf] %vm850, %v812
    %856 = vst.msk [vmem:[%s16 + $0x14] sm:$0xf] %vm850, %v836
    %857 = vst.msk [vmem:[%s16 + $0x18] sm:$0xf] %vm850, %v814
    %858 = vst.msk [vmem:[%s16 + $0x1c] sm:$0xf] %vm850, %v837
    %859 = vst.msk [vmem:[%s16 + $0x20] sm:$0xf] %vm850, %v817
    %860 = vst.msk [vmem:[%s16 + $0x24] sm:$0xf] %vm850, %v838
    %861 = vst.msk [vmem:[%s16 + $0x28] sm:$0xf] %vm850, %v819
    %862 = vst.msk [vmem:[%s16 + $0x2c] sm:$0xf] %vm850, %v839
    %863 = vst.msk [vmem:[%s16 + $0x30] sm:$0xf] %vm850, %v822
    %864 = vst.msk [vmem:[%s16 + $0x34] sm:$0xf] %vm850, %v840
    %865 = vst.msk [vmem:[%s16 + $0x38] sm:$0xf] %vm850, %v824
    %866 = vst.msk [vmem:[%s16 + $0x3c] sm:$0xf] %vm850, %v841
    // Predicated region
    $region86: #{tpu_custom_call.1} parent=1 // pred_check
      _
    $region87: #{tpu_custom_call.1} parent=1 // pred_check_branch
      %868 = sbr.rel (0) target = $region89
    $region88: #{tpu_custom_call.1} parent=1 // pred_region
      _
    $region89: #{tpu_custom_call.1} parent=1 // pred_fallthru
      _
    // Predicated region
    $region90: #{tpu_custom_call.1} parent=1 // pred_check
      _
    $region91: #{tpu_custom_call.1} parent=1 // pred_check_branch
      %870 = sbr.rel (0) target = $region93
    $region92: #{tpu_custom_call.1} parent=1 // pred_region
      _
    $region93: #{tpu_custom_call.1} parent=1 // pred_fallthru
      _
    %871 = vsyncpa [#allocation3], 1
    %872 = vsyncpa [#allocation5], 1
    %873 = vsyncpa [#allocation8], 1

</llo_original>
